<compile_context>
chip_gen: v7x
topology: tpu7x:2x2x1
jax: 0.10.0
libtpu: 0.0.40
codegen_flags: <defaults>
</compile_context>

<pallas_src>
import functools

import jax
import jax.numpy as jnp
from jax import lax
from jax.experimental import pallas as pl
from jax.experimental.pallas import tpu as pltpu

# MXU operand dtype. Accumulation (preferred_element_type) and all gate / cell
# elementwise math stay float32 (v5e has no bf16 VPU/EUP datapath anyway).
MATMUL_DTYPE = jnp.bfloat16


def _lstm_head_kernel(num_layers, T, BT, H, x_ref, *refs):
    """One batch tile: full multi-layer LSTM recurrence + linear head.

    refs = [wih_t_0, whh_t_0, b_0, ..., wih_t_{L-1}, whh_t_{L-1}, b_{L-1},
            head_w_t, head_b, out_ref, proj_scratch, seq_scratch]
    """
    layer_refs = refs[: 3 * num_layers]
    head_w_ref = refs[3 * num_layers]          # (H, O)      bf16
    head_b_ref = refs[3 * num_layers + 1]      # (1, O)      f32
    out_ref    = refs[3 * num_layers + 2]      # (BT, O)     f32
    proj_ref   = refs[3 * num_layers + 3]      # (T*BT, 4H)  f32   scratch
    seq_ref    = refs[3 * num_layers + 4]      # (T*BT, H)   bf16  scratch

    G = 4 * H
    # Static lane constants, hoisted out of all loops (JAX does not CSE broadcasts).
    # Gate order is (i, f, g, o): tanh on the g lane-block, sigmoid elsewhere.
    lane = lax.broadcasted_iota(jnp.int32, (BT, G), dimension=1)
    is_g_lane = (lane >= 2 * H) & (lane < 3 * H)
    gate_scale = jnp.where(is_g_lane, 2.0, 1.0).astype(jnp.float32)  # 2 on g lanes

    h_last = jnp.zeros((BT, H), MATMUL_DTYPE)

    for layer in range(num_layers):
        wih_t = layer_refs[3 * layer][...]       # (D_in, 4H) bf16
        whh_t = layer_refs[3 * layer + 1][...]   # (H, 4H)    bf16
        b     = layer_refs[3 * layer + 2][...]   # (1, 4H)    f32  (= b_ih + b_hh)
        last_layer = layer == num_layers - 1

        if layer == 0:
            # x arrives time-major (T, BT, D); collapsing the leading dims keeps the
            # per-step reads below identical (contiguous) for every layer.
            inp = x_ref[...].reshape(T * BT, -1)
        else:
            # Previous layer wrote time-major rows: row index = t*BT + b.
            inp = seq_ref[...]

        # One big input-projection matmul per layer (bf16 operands, f32 accum).
        proj_ref[...] = (
            jnp.dot(inp, wih_t, preferred_element_type=jnp.float32) + b)

        # TODO(synk): for non-toy H/T, hold whh_t on the MXU across the recurrence
        # (pltpu.matmul_push_rhs / matmul_acc_lhs / matmul_pop) instead of
        # re-pushing the weight tile every timestep.
        def step(t, carry, *, last_layer=last_layer, whh_t=whh_t):
            h_bf, c = carry                       # h carried already in bf16
            start = pl.multiple_of(t * BT, BT)
            g_in = proj_ref[pl.ds(start, BT), :]
            gates = g_in + jnp.dot(h_bf, whh_t, preferred_element_type=jnp.float32)
            # tanh(x) = 2*sigmoid(2x) - 1  ->  ONE full-vreg sigmoid over (BT,4H)
            # (plus a VPU FMA/select) instead of separate tanh + sigmoid passes.
            s = jax.nn.sigmoid(gates * gate_scale)
            act = jnp.where(is_g_lane, 2.0 * s - 1.0, s)
            i_g = act[:, 0 * H:1 * H]
            f_g = act[:, 1 * H:2 * H]
            g_g = act[:, 2 * H:3 * H]
            o_g = act[:, 3 * H:4 * H]
            c = f_g * c + i_g * g_g
            # Single bf16 cast per step, reused for the seq store AND as the next
            # step's recurrent-matmul LHS.
            h_bf = (o_g * jnp.tanh(c)).astype(MATMUL_DTYPE)
            if not last_layer:   # the last layer's sequence is never read: skip
                seq_ref[pl.ds(start, BT), :] = h_bf
            return (h_bf, c)

        h0 = jnp.zeros((BT, H), MATMUL_DTYPE)
        c0 = jnp.zeros((BT, H), jnp.float32)
        # T is a compile-time constant; fully unroll so the LLO scheduler can hide
        # the tiny per-step matmul under the elementwise gate math.
        # TODO(synk): switch to partial unroll (unroll=4/8) for large T.
        h_last, _ = lax.fori_loop(0, T, step, (h0, c0), unroll=True)

    # Linear head on the last timestep of the last layer.
    # TODO(synk): pad the output lane dim to a multiple of 128 (and slice outside)
    # if output_dim grows; O=8 masked stores are negligible here.
    out_ref[...] = (
        jnp.dot(h_last, head_w_ref[...], preferred_element_type=jnp.float32)
        + head_b_ref[...])


def _default_batch_tile(B):
    """1 grid block on single-TC chips (v5e/v6e), 2 blocks on v7x (2 TCs)."""
    kind = ""
    try:
        kind = (jax.devices()[0].device_kind or "").lower()
    except Exception:
        pass
    if "v7" in kind and B % 2 == 0 and (B // 2) % 8 == 0:
        return B // 2
    return B


def lstm_head_forward(x, params, hidden_dim, output_dim, *, batch_tile=None):
    """x: (B, T, D) float32 (batch_first, same as the nn.Module). Returns (B, O) f32."""
    B, T, D = x.shape
    num_layers = len(params["layers"])
    BT = batch_tile if batch_tile is not None else _default_batch_tile(B)
    if B % BT != 0:
        BT = B  # explicit single-block fallback

    # Time-major x in HBM (one tiny wrapper-side transpose) so the kernel never
    # does strided per-timestep readbacks for layer 0.
    x_tm = jnp.transpose(x, (1, 0, 2)).astype(MATMUL_DTYPE)   # (T, B, D)

    inputs = [x_tm]
    in_specs = [pl.BlockSpec((T, BT, D), lambda i: (0, i, 0))]
    for wih_t, whh_t, b in params["layers"]:
        inputs += [wih_t.astype(MATMUL_DTYPE), whh_t.astype(MATMUL_DTYPE), b]
        in_specs += [
            pl.BlockSpec(wih_t.shape, lambda i: (0, 0)),
            pl.BlockSpec(whh_t.shape, lambda i: (0, 0)),
            pl.BlockSpec(b.shape, lambda i: (0, 0)),
        ]
    inputs += [params["head_w_t"].astype(MATMUL_DTYPE), params["head_b"]]
    in_specs += [
        pl.BlockSpec(params["head_w_t"].shape, lambda i: (0, 0)),
        pl.BlockSpec(params["head_b"].shape, lambda i: (0, 0)),
    ]

    # TODO(synk): for non-toy T/B/H (esp. v7x's 64 MiB VMEM), store proj in bf16,
    # chunk the per-layer input projection over T (pltpu.emit_pipeline) and stream
    # per-layer W_ih/W_hh from HBM instead of keeping everything VMEM-resident.
    kernel = functools.partial(_lstm_head_kernel, num_layers, T, BT, hidden_dim)
    return pl.pallas_call(
        kernel,
        out_shape=jax.ShapeDtypeStruct((B, output_dim), jnp.float32),
        grid=(B // BT,),
        in_specs=in_specs,
        out_specs=pl.BlockSpec((BT, output_dim), lambda i: (i, 0)),
        scratch_shapes=[
            pltpu.VMEM((T * BT, 4 * hidden_dim), jnp.float32),   # gate projections
            pltpu.VMEM((T * BT, hidden_dim), MATMUL_DTYPE),      # inter-layer sequence
        ],
        compiler_params=pltpu.CompilerParams(
            dimension_semantics=("parallel",)),   # batch tiles shard across TCs
    )(*inputs)


def init_params(key, input_dim, hidden_dim, num_layers, output_dim):
    """Deterministic init mimicking nn.LSTM / nn.Linear shapes (weights stored
    pre-transposed for the kernel, biases fused as b_ih + b_hh). Kept in f32;
    the wrapper casts MXU operands to bf16."""
    k = 1.0 / jnp.sqrt(jnp.float32(hidden_dim))
    layers = []
    for layer in range(num_layers):
        d_in = input_dim if layer == 0 else hidden_dim
        key, k1, k2, k3, k4 = jax.random.split(key, 5)
        w_ih = jax.random.uniform(k1, (4 * hidden_dim, d_in), jnp.float32, -k, k)
        w_hh = jax.random.uniform(k2, (4 * hidden_dim, hidden_dim), jnp.float32, -k, k)
        b_ih = jax.random.uniform(k3, (4 * hidden_dim,), jnp.float32, -k, k)
        b_hh = jax.random.uniform(k4, (4 * hidden_dim,), jnp.float32, -k, k)
        layers.append((w_ih.T, w_hh.T, (b_ih + b_hh)[None, :]))
    key, k5, k6 = jax.random.split(key, 3)
    head_w = jax.random.uniform(k5, (output_dim, hidden_dim), jnp.float32, -k, k)
    head_b = jax.random.uniform(k6, (output_dim,), jnp.float32, -k, k)
    return {"layers": layers, "head_w_t": head_w.T, "head_b": head_b[None, :]}


def ref_forward(x, params, H):
    """Pure-JAX f32 reference (same math as torch.nn.LSTM, gate order i,f,g,o)."""
    B, T, _ = x.shape
    seq = x
    for wih_t, whh_t, b in params["layers"]:
        h = jnp.zeros((B, H), jnp.float32)
        c = jnp.zeros((B, H), jnp.float32)
        outs = []
        for t in range(T):
            g = seq[:, t, :] @ wih_t + h @ whh_t + b
            i = jax.nn.sigmoid(g[:, :H])
            f = jax.nn.sigmoid(g[:, H:2 * H])
            gg = jnp.tanh(g[:, 2 * H:3 * H])
            o = jax.nn.sigmoid(g[:, 3 * H:])
            c = f * c + i * gg
            h = o * jnp.tanh(c)
            outs.append(h)
        seq = jnp.stack(outs, axis=1)
    return seq[:, -1, :] @ params["head_w_t"] + params["head_b"]


if __name__ == "__main__":
    input_dim, hidden_dim, num_layers, output_dim = 16, 32, 2, 8
    batch, seq_len = 16, 8

    key = jax.random.PRNGKey(0)
    kx, kp = jax.random.split(key)
    x = jax.random.normal(kx, (batch, seq_len, input_dim), jnp.float32)
    params = init_params(kp, input_dim, hidden_dim, num_layers, output_dim)

    out = lstm_head_forward(x, params, hidden_dim, output_dim)
    out = jax.block_until_ready(out)

    ref = ref_forward(x, params, hidden_dim)
    assert out.shape == (batch, output_dim)
    # Tolerance loosened because MXU operands are bf16 (f32 accumulation / cell math).
    assert jnp.allclose(out, ref, rtol=5e-2, atol=5e-2), "mismatch vs reference"

    print("KERNEL_OK")
</pallas_src>

<mosaic_0001>
module attributes {stable_mosaic.version = 11 : i64} {
  func.func @_lstm_head_kernel(%arg0: i32, %arg1: memref<8x16x16xbf16, #tpu.memory_space<vmem>>, %arg2: memref<16x128xbf16, #tpu.memory_space<vmem>>, %arg3: memref<32x128xbf16, #tpu.memory_space<vmem>>, %arg4: memref<1x128xf32, #tpu.memory_space<vmem>>, %arg5: memref<32x128xbf16, #tpu.memory_space<vmem>>, %arg6: memref<32x128xbf16, #tpu.memory_space<vmem>>, %arg7: memref<1x128xf32, #tpu.memory_space<vmem>>, %arg8: memref<32x8xbf16, #tpu.memory_space<vmem>>, %arg9: memref<1x8xf32, #tpu.memory_space<vmem>>, %arg10: memref<16x8xf32, #tpu.memory_space<vmem>>, %arg11: memref<128x128xf32, #tpu.memory_space<vmem>>, %arg12: memref<128x32xbf16, #tpu.memory_space<vmem>>) attributes {dimension_semantics = [#tpu.dimension_semantics<parallel>], iteration_bounds = array<i64: 1>, scalar_prefetch = 0 : i64, scratch_operands = 2 : i64, tpu.core_type = #tpu.core_type<tc>, window_params = [{transform_indices = @transform_0, window_bounds = array<i64: 8, 16, 16>}, {pipeline_mode = #tpu.pipeline_mode<synchronous>, transform_indices = @transform_1, window_bounds = array<i64: 16, 128>}, {pipeline_mode = #tpu.pipeline_mode<synchronous>, transform_indices = @transform_2, window_bounds = array<i64: 32, 128>}, {pipeline_mode = #tpu.pipeline_mode<synchronous>, transform_indices = @transform_3, window_bounds = array<i64: 1, 128>}, {pipeline_mode = #tpu.pipeline_mode<synchronous>, transform_indices = @transform_4, window_bounds = array<i64: 32, 128>}, {pipeline_mode = #tpu.pipeline_mode<synchronous>, transform_indices = @transform_5, window_bounds = array<i64: 32, 128>}, {pipeline_mode = #tpu.pipeline_mode<synchronous>, transform_indices = @transform_6, window_bounds = array<i64: 1, 128>}, {pipeline_mode = #tpu.pipeline_mode<synchronous>, transform_indices = @transform_7, window_bounds = array<i64: 32, 8>}, {pipeline_mode = #tpu.pipeline_mode<synchronous>, transform_indices = @transform_8, window_bounds = array<i64: 1, 8>}, {transform_indices = @transform_9, window_bounds = array<i64: 16, 8>}]} {
    %0 = tpu.iota {dimensions = array<i32: 1>} : vector<16x128xi32>
    %c64_i32 = arith.constant 64 : i32
    %1 = vector.broadcast %c64_i32 : i32 to vector<16x128xi32>
    %2 = arith.cmpi sge, %0, %1 : vector<16x128xi32>
    %c96_i32 = arith.constant 96 : i32
    %3 = vector.broadcast %c96_i32 : i32 to vector<16x128xi32>
    %4 = arith.cmpi slt, %0, %3 : vector<16x128xi32>
    %5 = arith.andi %2, %4 : vector<16x128xi1>
    %cst = arith.constant 2.000000e+00 : f32
    %cst_0 = arith.constant 1.000000e+00 : f32
    %6 = vector.broadcast %cst : f32 to vector<16x128xf32>
    %7 = vector.broadcast %cst_0 : f32 to vector<16x128xf32>
    %8 = arith.select %5, %6, %7 : vector<16x128xi1>, vector<16x128xf32>
    %c0 = arith.constant 0 : index
    %c0_1 = arith.constant 0 : index
    %9 = vector.load %arg2[%c0, %c0_1] : memref<16x128xbf16, #tpu.memory_space<vmem>>, vector<16x128xbf16>
    %c0_2 = arith.constant 0 : index
    %c0_3 = arith.constant 0 : index
    %10 = vector.load %arg3[%c0_2, %c0_3] : memref<32x128xbf16, #tpu.memory_space<vmem>>, vector<32x128xbf16>
    %c0_4 = arith.constant 0 : index
    %c0_5 = arith.constant 0 : index
    %11 = vector.load %arg4[%c0_4, %c0_5] : memref<1x128xf32, #tpu.memory_space<vmem>>, vector<1x128xf32>
    %c0_6 = arith.constant 0 : index
    %c0_7 = arith.constant 0 : index
    %c0_8 = arith.constant 0 : index
    %12 = vector.load %arg1[%c0_6, %c0_7, %c0_8] : memref<8x16x16xbf16, #tpu.memory_space<vmem>>, vector<8x16x16xbf16>
    %13 = vector.shape_cast %12 : vector<8x16x16xbf16> to vector<128x16xbf16>
    %cst_9 = arith.constant dense<0.000000e+00> : vector<128x128xf32>
    %14 = tpu.matmul %13, %9, %cst_9 {dimension_numbers = #tpu.dot_dimension_numbers<[1], [0], [0], [1], [0, 0, 1, 1], [], []>} : vector<128x16xbf16>, vector<16x128xbf16>, vector<128x128xf32> -> vector<128x128xf32>
    %15 = vector.broadcast %11 : vector<1x128xf32> to vector<128x128xf32>
    %16 = arith.addf %14, %15 : vector<128x128xf32>
    %c0_10 = arith.constant 0 : index
    %c0_11 = arith.constant 0 : index
    %17 = vector.load %arg11[%c0_10, %c0_11] : memref<128x128xf32, #tpu.memory_space<vmem>>, vector<128x128xf32>
    tpu.vector_store %arg11[%c0_10, %c0_11], %16 {strides = array<i32>} : memref<128x128xf32, #tpu.memory_space<vmem>>, vector<128x128xf32>,
    %cst_12 = arith.constant 0.000000e+00 : bf16
    %18 = vector.broadcast %cst_12 : bf16 to vector<16x32xbf16>
    %cst_13 = arith.constant 0.000000e+00 : f32
    %19 = vector.broadcast %cst_13 : f32 to vector<16x32xf32>
    %c0_i32 = arith.constant 0 : i32
    %c16_i32 = arith.constant 16 : i32
    %20 = arith.muli %c0_i32, %c16_i32 : i32
    %21 = tpu.assume_multiple %20, 16 : i32
    %22 = arith.index_cast %21 : i32 to index
    %c0_14 = arith.constant 0 : index
    %23 = vector.load %arg11[%22, %c0_14] : memref<128x128xf32, #tpu.memory_space<vmem>>, vector<16x128xf32>
    %cst_15 = arith.constant dense<0.000000e+00> : vector<16x128xf32>
    %24 = tpu.matmul %18, %10, %cst_15 {dimension_numbers = #tpu.dot_dimension_numbers<[1], [0], [0], [1], [0, 0, 1, 1], [], []>} : vector<16x32xbf16>, vector<32x128xbf16>, vector<16x128xf32> -> vector<16x128xf32>
    %25 = arith.addf %23, %24 : vector<16x128xf32>
    %26 = arith.mulf %25, %8 : vector<16x128xf32>
    %27 = arith.negf %26 : vector<16x128xf32>
    %28 = math.exp %27 : vector<16x128xf32>
    %cst_16 = arith.constant 1.000000e+00 : f32
    %29 = vector.broadcast %cst_16 : f32 to vector<16x128xf32>
    %30 = arith.addf %29, %28 : vector<16x128xf32>
    %31 = arith.divf %29, %30 : vector<16x128xf32>
    %cst_17 = arith.constant 2.000000e+00 : f32
    %32 = vector.broadcast %cst_17 : f32 to vector<16x128xf32>
    %33 = arith.mulf %32, %31 : vector<16x128xf32>
    %cst_18 = arith.constant 1.000000e+00 : f32
    %34 = vector.broadcast %cst_18 : f32 to vector<16x128xf32>
    %35 = arith.subf %33, %34 : vector<16x128xf32>
    %36 = arith.select %5, %35, %31 : vector<16x128xi1>, vector<16x128xf32>
    %37 = vector.extract_strided_slice %36 {offsets = [0, 0], sizes = [16, 32], strides = [1, 1]} : vector<16x128xf32> to vector<16x32xf32>
    %38 = vector.extract_strided_slice %36 {offsets = [0, 32], sizes = [16, 32], strides = [1, 1]} : vector<16x128xf32> to vector<16x32xf32>
    %39 = vector.extract_strided_slice %36 {offsets = [0, 64], sizes = [16, 32], strides = [1, 1]} : vector<16x128xf32> to vector<16x32xf32>
    %40 = vector.extract_strided_slice %36 {offsets = [0, 96], sizes = [16, 32], strides = [1, 1]} : vector<16x128xf32> to vector<16x32xf32>
    %41 = arith.mulf %38, %19 : vector<16x32xf32>
    %42 = arith.mulf %37, %39 : vector<16x32xf32>
    %43 = arith.addf %41, %42 : vector<16x32xf32>
    %44 = math.tanh %43 : vector<16x32xf32>
    %45 = arith.mulf %40, %44 : vector<16x32xf32>
    %46 = arith.truncf %45 : vector<16x32xf32> to vector<16x32xbf16>
    %47 = arith.index_cast %21 : i32 to index
    %c0_19 = arith.constant 0 : index
    %48 = vector.load %arg12[%47, %c0_19] : memref<128x32xbf16, #tpu.memory_space<vmem>>, vector<16x32xbf16>
    tpu.vector_store %arg12[%47, %c0_19], %46 {strides = array<i32>} : memref<128x32xbf16, #tpu.memory_space<vmem>>, vector<16x32xbf16>,
    %c1_i32 = arith.constant 1 : i32
    %c16_i32_20 = arith.constant 16 : i32
    %49 = arith.muli %c1_i32, %c16_i32_20 : i32
    %50 = tpu.assume_multiple %49, 16 : i32
    %51 = arith.index_cast %50 : i32 to index
    %c0_21 = arith.constant 0 : index
    %52 = vector.load %arg11[%51, %c0_21] : memref<128x128xf32, #tpu.memory_space<vmem>>, vector<16x128xf32>
    %cst_22 = arith.constant dense<0.000000e+00> : vector<16x128xf32>
    %53 = tpu.matmul %46, %10, %cst_22 {dimension_numbers = #tpu.dot_dimension_numbers<[1], [0], [0], [1], [0, 0, 1, 1], [], []>} : vector<16x32xbf16>, vector<32x128xbf16>, vector<16x128xf32> -> vector<16x128xf32>
    %54 = arith.addf %52, %53 : vector<16x128xf32>
    %55 = arith.mulf %54, %8 : vector<16x128xf32>
    %56 = arith.negf %55 : vector<16x128xf32>
    %57 = math.exp %56 : vector<16x128xf32>
    %cst_23 = arith.constant 1.000000e+00 : f32
    %58 = vector.broadcast %cst_23 : f32 to vector<16x128xf32>
    %59 = arith.addf %58, %57 : vector<16x128xf32>
    %60 = arith.divf %58, %59 : vector<16x128xf32>
    %cst_24 = arith.constant 2.000000e+00 : f32
    %61 = vector.broadcast %cst_24 : f32 to vector<16x128xf32>
    %62 = arith.mulf %61, %60 : vector<16x128xf32>
    %cst_25 = arith.constant 1.000000e+00 : f32
    %63 = vector.broadcast %cst_25 : f32 to vector<16x128xf32>
    %64 = arith.subf %62, %63 : vector<16x128xf32>
    %65 = arith.select %5, %64, %60 : vector<16x128xi1>, vector<16x128xf32>
    %66 = vector.extract_strided_slice %65 {offsets = [0, 0], sizes = [16, 32], strides = [1, 1]} : vector<16x128xf32> to vector<16x32xf32>
    %67 = vector.extract_strided_slice %65 {offsets = [0, 32], sizes = [16, 32], strides = [1, 1]} : vector<16x128xf32> to vector<16x32xf32>
    %68 = vector.extract_strided_slice %65 {offsets = [0, 64], sizes = [16, 32], strides = [1, 1]} : vector<16x128xf32> to vector<16x32xf32>
    %69 = vector.extract_strided_slice %65 {offsets = [0, 96], sizes = [16, 32], strides = [1, 1]} : vector<16x128xf32> to vector<16x32xf32>
    %70 = arith.mulf %67, %43 : vector<16x32xf32>
    %71 = arith.mulf %66, %68 : vector<16x32xf32>
    %72 = arith.addf %70, %71 : vector<16x32xf32>
    %73 = math.tanh %72 : vector<16x32xf32>
    %74 = arith.mulf %69, %73 : vector<16x32xf32>
    %75 = arith.truncf %74 : vector<16x32xf32> to vector<16x32xbf16>
    %76 = arith.index_cast %50 : i32 to index
    %c0_26 = arith.constant 0 : index
    %77 = vector.load %arg12[%76, %c0_26] : memref<128x32xbf16, #tpu.memory_space<vmem>>, vector<16x32xbf16>
    tpu.vector_store %arg12[%76, %c0_26], %75 {strides = array<i32>} : memref<128x32xbf16, #tpu.memory_space<vmem>>, vector<16x32xbf16>,
    %c2_i32 = arith.constant 2 : i32
    %c16_i32_27 = arith.constant 16 : i32
    %78 = arith.muli %c2_i32, %c16_i32_27 : i32
    %79 = tpu.assume_multiple %78, 16 : i32
    %80 = arith.index_cast %79 : i32 to index
    %c0_28 = arith.constant 0 : index
    %81 = vector.load %arg11[%80, %c0_28] : memref<128x128xf32, #tpu.memory_space<vmem>>, vector<16x128xf32>
    %cst_29 = arith.constant dense<0.000000e+00> : vector<16x128xf32>
    %82 = tpu.matmul %75, %10, %cst_29 {dimension_numbers = #tpu.dot_dimension_numbers<[1], [0], [0], [1], [0, 0, 1, 1], [], []>} : vector<16x32xbf16>, vector<32x128xbf16>, vector<16x128xf32> -> vector<16x128xf32>
    %83 = arith.addf %81, %82 : vector<16x128xf32>
    %84 = arith.mulf %83, %8 : vector<16x128xf32>
    %85 = arith.negf %84 : vector<16x128xf32>
    %86 = math.exp %85 : vector<16x128xf32>
    %cst_30 = arith.constant 1.000000e+00 : f32
    %87 = vector.broadcast %cst_30 : f32 to vector<16x128xf32>
    %88 = arith.addf %87, %86 : vector<16x128xf32>
    %89 = arith.divf %87, %88 : vector<16x128xf32>
    %cst_31 = arith.constant 2.000000e+00 : f32
    %90 = vector.broadcast %cst_31 : f32 to vector<16x128xf32>
    %91 = arith.mulf %90, %89 : vector<16x128xf32>
    %cst_32 = arith.constant 1.000000e+00 : f32
    %92 = vector.broadcast %cst_32 : f32 to vector<16x128xf32>
    %93 = arith.subf %91, %92 : vector<16x128xf32>
    %94 = arith.select %5, %93, %89 : vector<16x128xi1>, vector<16x128xf32>
    %95 = vector.extract_strided_slice %94 {offsets = [0, 0], sizes = [16, 32], strides = [1, 1]} : vector<16x128xf32> to vector<16x32xf32>
    %96 = vector.extract_strided_slice %94 {offsets = [0, 32], sizes = [16, 32], strides = [1, 1]} : vector<16x128xf32> to vector<16x32xf32>
    %97 = vector.extract_strided_slice %94 {offsets = [0, 64], sizes = [16, 32], strides = [1, 1]} : vector<16x128xf32> to vector<16x32xf32>
    %98 = vector.extract_strided_slice %94 {offsets = [0, 96], sizes = [16, 32], strides = [1, 1]} : vector<16x128xf32> to vector<16x32xf32>
    %99 = arith.mulf %96, %72 : vector<16x32xf32>
    %100 = arith.mulf %95, %97 : vector<16x32xf32>
    %101 = arith.addf %99, %100 : vector<16x32xf32>
    %102 = math.tanh %101 : vector<16x32xf32>
    %103 = arith.mulf %98, %102 : vector<16x32xf32>
    %104 = arith.truncf %103 : vector<16x32xf32> to vector<16x32xbf16>
    %105 = arith.index_cast %79 : i32 to index
    %c0_33 = arith.constant 0 : index
    %106 = vector.load %arg12[%105, %c0_33] : memref<128x32xbf16, #tpu.memory_space<vmem>>, vector<16x32xbf16>
    tpu.vector_store %arg12[%105, %c0_33], %104 {strides = array<i32>} : memref<128x32xbf16, #tpu.memory_space<vmem>>, vector<16x32xbf16>,
    %c3_i32 = arith.constant 3 : i32
    %c16_i32_34 = arith.constant 16 : i32
    %107 = arith.muli %c3_i32, %c16_i32_34 : i32
    %108 = tpu.assume_multiple %107, 16 : i32
    %109 = arith.index_cast %108 : i32 to index
    %c0_35 = arith.constant 0 : index
    %110 = vector.load %arg11[%109, %c0_35] : memref<128x128xf32, #tpu.memory_space<vmem>>, vector<16x128xf32>
    %cst_36 = arith.constant dense<0.000000e+00> : vector<16x128xf32>
    %111 = tpu.matmul %104, %10, %cst_36 {dimension_numbers = #tpu.dot_dimension_numbers<[1], [0], [0], [1], [0, 0, 1, 1], [], []>} : vector<16x32xbf16>, vector<32x128xbf16>, vector<16x128xf32> -> vector<16x128xf32>
    %112 = arith.addf %110, %111 : vector<16x128xf32>
    %113 = arith.mulf %112, %8 : vector<16x128xf32>
    %114 = arith.negf %113 : vector<16x128xf32>
    %115 = math.exp %114 : vector<16x128xf32>
    %cst_37 = arith.constant 1.000000e+00 : f32
    %116 = vector.broadcast %cst_37 : f32 to vector<16x128xf32>
    %117 = arith.addf %116, %115 : vector<16x128xf32>
    %118 = arith.divf %116, %117 : vector<16x128xf32>
    %cst_38 = arith.constant 2.000000e+00 : f32
    %119 = vector.broadcast %cst_38 : f32 to vector<16x128xf32>
    %120 = arith.mulf %119, %118 : vector<16x128xf32>
    %cst_39 = arith.constant 1.000000e+00 : f32
    %121 = vector.broadcast %cst_39 : f32 to vector<16x128xf32>
    %122 = arith.subf %120, %121 : vector<16x128xf32>
    %123 = arith.select %5, %122, %118 : vector<16x128xi1>, vector<16x128xf32>
    %124 = vector.extract_strided_slice %123 {offsets = [0, 0], sizes = [16, 32], strides = [1, 1]} : vector<16x128xf32> to vector<16x32xf32>
    %125 = vector.extract_strided_slice %123 {offsets = [0, 32], sizes = [16, 32], strides = [1, 1]} : vector<16x128xf32> to vector<16x32xf32>
    %126 = vector.extract_strided_slice %123 {offsets = [0, 64], sizes = [16, 32], strides = [1, 1]} : vector<16x128xf32> to vector<16x32xf32>
    %127 = vector.extract_strided_slice %123 {offsets = [0, 96], sizes = [16, 32], strides = [1, 1]} : vector<16x128xf32> to vector<16x32xf32>
    %128 = arith.mulf %125, %101 : vector<16x32xf32>
    %129 = arith.mulf %124, %126 : vector<16x32xf32>
    %130 = arith.addf %128, %129 : vector<16x32xf32>
    %131 = math.tanh %130 : vector<16x32xf32>
    %132 = arith.mulf %127, %131 : vector<16x32xf32>
    %133 = arith.truncf %132 : vector<16x32xf32> to vector<16x32xbf16>
    %134 = arith.index_cast %108 : i32 to index
    %c0_40 = arith.constant 0 : index
    %135 = vector.load %arg12[%134, %c0_40] : memref<128x32xbf16, #tpu.memory_space<vmem>>, vector<16x32xbf16>
    tpu.vector_store %arg12[%134, %c0_40], %133 {strides = array<i32>} : memref<128x32xbf16, #tpu.memory_space<vmem>>, vector<16x32xbf16>,
    %c4_i32 = arith.constant 4 : i32
    %c16_i32_41 = arith.constant 16 : i32
    %136 = arith.muli %c4_i32, %c16_i32_41 : i32
    %137 = tpu.assume_multiple %136, 16 : i32
    %138 = arith.index_cast %137 : i32 to index
    %c0_42 = arith.constant 0 : index
    %139 = vector.load %arg11[%138, %c0_42] : memref<128x128xf32, #tpu.memory_space<vmem>>, vector<16x128xf32>
    %cst_43 = arith.constant dense<0.000000e+00> : vector<16x128xf32>
    %140 = tpu.matmul %133, %10, %cst_43 {dimension_numbers = #tpu.dot_dimension_numbers<[1], [0], [0], [1], [0, 0, 1, 1], [], []>} : vector<16x32xbf16>, vector<32x128xbf16>, vector<16x128xf32> -> vector<16x128xf32>
    %141 = arith.addf %139, %140 : vector<16x128xf32>
    %142 = arith.mulf %141, %8 : vector<16x128xf32>
    %143 = arith.negf %142 : vector<16x128xf32>
    %144 = math.exp %143 : vector<16x128xf32>
    %cst_44 = arith.constant 1.000000e+00 : f32
    %145 = vector.broadcast %cst_44 : f32 to vector<16x128xf32>
    %146 = arith.addf %145, %144 : vector<16x128xf32>
    %147 = arith.divf %145, %146 : vector<16x128xf32>
    %cst_45 = arith.constant 2.000000e+00 : f32
    %148 = vector.broadcast %cst_45 : f32 to vector<16x128xf32>
    %149 = arith.mulf %148, %147 : vector<16x128xf32>
    %cst_46 = arith.constant 1.000000e+00 : f32
    %150 = vector.broadcast %cst_46 : f32 to vector<16x128xf32>
    %151 = arith.subf %149, %150 : vector<16x128xf32>
    %152 = arith.select %5, %151, %147 : vector<16x128xi1>, vector<16x128xf32>
    %153 = vector.extract_strided_slice %152 {offsets = [0, 0], sizes = [16, 32], strides = [1, 1]} : vector<16x128xf32> to vector<16x32xf32>
    %154 = vector.extract_strided_slice %152 {offsets = [0, 32], sizes = [16, 32], strides = [1, 1]} : vector<16x128xf32> to vector<16x32xf32>
    %155 = vector.extract_strided_slice %152 {offsets = [0, 64], sizes = [16, 32], strides = [1, 1]} : vector<16x128xf32> to vector<16x32xf32>
    %156 = vector.extract_strided_slice %152 {offsets = [0, 96], sizes = [16, 32], strides = [1, 1]} : vector<16x128xf32> to vector<16x32xf32>
    %157 = arith.mulf %154, %130 : vector<16x32xf32>
    %158 = arith.mulf %153, %155 : vector<16x32xf32>
    %159 = arith.addf %157, %158 : vector<16x32xf32>
    %160 = math.tanh %159 : vector<16x32xf32>
    %161 = arith.mulf %156, %160 : vector<16x32xf32>
    %162 = arith.truncf %161 : vector<16x32xf32> to vector<16x32xbf16>
    %163 = arith.index_cast %137 : i32 to index
    %c0_47 = arith.constant 0 : index
    %164 = vector.load %arg12[%163, %c0_47] : memref<128x32xbf16, #tpu.memory_space<vmem>>, vector<16x32xbf16>
    tpu.vector_store %arg12[%163, %c0_47], %162 {strides = array<i32>} : memref<128x32xbf16, #tpu.memory_space<vmem>>, vector<16x32xbf16>,
    %c5_i32 = arith.constant 5 : i32
    %c16_i32_48 = arith.constant 16 : i32
    %165 = arith.muli %c5_i32, %c16_i32_48 : i32
    %166 = tpu.assume_multiple %165, 16 : i32
    %167 = arith.index_cast %166 : i32 to index
    %c0_49 = arith.constant 0 : index
    %168 = vector.load %arg11[%167, %c0_49] : memref<128x128xf32, #tpu.memory_space<vmem>>, vector<16x128xf32>
    %cst_50 = arith.constant dense<0.000000e+00> : vector<16x128xf32>
    %169 = tpu.matmul %162, %10, %cst_50 {dimension_numbers = #tpu.dot_dimension_numbers<[1], [0], [0], [1], [0, 0, 1, 1], [], []>} : vector<16x32xbf16>, vector<32x128xbf16>, vector<16x128xf32> -> vector<16x128xf32>
    %170 = arith.addf %168, %169 : vector<16x128xf32>
    %171 = arith.mulf %170, %8 : vector<16x128xf32>
    %172 = arith.negf %171 : vector<16x128xf32>
    %173 = math.exp %172 : vector<16x128xf32>
    %cst_51 = arith.constant 1.000000e+00 : f32
    %174 = vector.broadcast %cst_51 : f32 to vector<16x128xf32>
    %175 = arith.addf %174, %173 : vector<16x128xf32>
    %176 = arith.divf %174, %175 : vector<16x128xf32>
    %cst_52 = arith.constant 2.000000e+00 : f32
    %177 = vector.broadcast %cst_52 : f32 to vector<16x128xf32>
    %178 = arith.mulf %177, %176 : vector<16x128xf32>
    %cst_53 = arith.constant 1.000000e+00 : f32
    %179 = vector.broadcast %cst_53 : f32 to vector<16x128xf32>
    %180 = arith.subf %178, %179 : vector<16x128xf32>
    %181 = arith.select %5, %180, %176 : vector<16x128xi1>, vector<16x128xf32>
    %182 = vector.extract_strided_slice %181 {offsets = [0, 0], sizes = [16, 32], strides = [1, 1]} : vector<16x128xf32> to vector<16x32xf32>
    %183 = vector.extract_strided_slice %181 {offsets = [0, 32], sizes = [16, 32], strides = [1, 1]} : vector<16x128xf32> to vector<16x32xf32>
    %184 = vector.extract_strided_slice %181 {offsets = [0, 64], sizes = [16, 32], strides = [1, 1]} : vector<16x128xf32> to vector<16x32xf32>
    %185 = vector.extract_strided_slice %181 {offsets = [0, 96], sizes = [16, 32], strides = [1, 1]} : vector<16x128xf32> to vector<16x32xf32>
    %186 = arith.mulf %183, %159 : vector<16x32xf32>
    %187 = arith.mulf %182, %184 : vector<16x32xf32>
    %188 = arith.addf %186, %187 : vector<16x32xf32>
    %189 = math.tanh %188 : vector<16x32xf32>
    %190 = arith.mulf %185, %189 : vector<16x32xf32>
    %191 = arith.truncf %190 : vector<16x32xf32> to vector<16x32xbf16>
    %192 = arith.index_cast %166 : i32 to index
    %c0_54 = arith.constant 0 : index
    %193 = vector.load %arg12[%192, %c0_54] : memref<128x32xbf16, #tpu.memory_space<vmem>>, vector<16x32xbf16>
    tpu.vector_store %arg12[%192, %c0_54], %191 {strides = array<i32>} : memref<128x32xbf16, #tpu.memory_space<vmem>>, vector<16x32xbf16>,
    %c6_i32 = arith.constant 6 : i32
    %c16_i32_55 = arith.constant 16 : i32
    %194 = arith.muli %c6_i32, %c16_i32_55 : i32
    %195 = tpu.assume_multiple %194, 16 : i32
    %196 = arith.index_cast %195 : i32 to index
    %c0_56 = arith.constant 0 : index
    %197 = vector.load %arg11[%196, %c0_56] : memref<128x128xf32, #tpu.memory_space<vmem>>, vector<16x128xf32>
    %cst_57 = arith.constant dense<0.000000e+00> : vector<16x128xf32>
    %198 = tpu.matmul %191, %10, %cst_57 {dimension_numbers = #tpu.dot_dimension_numbers<[1], [0], [0], [1], [0, 0, 1, 1], [], []>} : vector<16x32xbf16>, vector<32x128xbf16>, vector<16x128xf32> -> vector<16x128xf32>
    %199 = arith.addf %197, %198 : vector<16x128xf32>
    %200 = arith.mulf %199, %8 : vector<16x128xf32>
    %201 = arith.negf %200 : vector<16x128xf32>
    %202 = math.exp %201 : vector<16x128xf32>
    %cst_58 = arith.constant 1.000000e+00 : f32
    %203 = vector.broadcast %cst_58 : f32 to vector<16x128xf32>
    %204 = arith.addf %203, %202 : vector<16x128xf32>
    %205 = arith.divf %203, %204 : vector<16x128xf32>
    %cst_59 = arith.constant 2.000000e+00 : f32
    %206 = vector.broadcast %cst_59 : f32 to vector<16x128xf32>
    %207 = arith.mulf %206, %205 : vector<16x128xf32>
    %cst_60 = arith.constant 1.000000e+00 : f32
    %208 = vector.broadcast %cst_60 : f32 to vector<16x128xf32>
    %209 = arith.subf %207, %208 : vector<16x128xf32>
    %210 = arith.select %5, %209, %205 : vector<16x128xi1>, vector<16x128xf32>
    %211 = vector.extract_strided_slice %210 {offsets = [0, 0], sizes = [16, 32], strides = [1, 1]} : vector<16x128xf32> to vector<16x32xf32>
    %212 = vector.extract_strided_slice %210 {offsets = [0, 32], sizes = [16, 32], strides = [1, 1]} : vector<16x128xf32> to vector<16x32xf32>
    %213 = vector.extract_strided_slice %210 {offsets = [0, 64], sizes = [16, 32], strides = [1, 1]} : vector<16x128xf32> to vector<16x32xf32>
    %214 = vector.extract_strided_slice %210 {offsets = [0, 96], sizes = [16, 32], strides = [1, 1]} : vector<16x128xf32> to vector<16x32xf32>
    %215 = arith.mulf %212, %188 : vector<16x32xf32>
    %216 = arith.mulf %211, %213 : vector<16x32xf32>
    %217 = arith.addf %215, %216 : vector<16x32xf32>
    %218 = math.tanh %217 : vector<16x32xf32>
    %219 = arith.mulf %214, %218 : vector<16x32xf32>
    %220 = arith.truncf %219 : vector<16x32xf32> to vector<16x32xbf16>
    %221 = arith.index_cast %195 : i32 to index
    %c0_61 = arith.constant 0 : index
    %222 = vector.load %arg12[%221, %c0_61] : memref<128x32xbf16, #tpu.memory_space<vmem>>, vector<16x32xbf16>
    tpu.vector_store %arg12[%221, %c0_61], %220 {strides = array<i32>} : memref<128x32xbf16, #tpu.memory_space<vmem>>, vector<16x32xbf16>,
    %c7_i32 = arith.constant 7 : i32
    %c16_i32_62 = arith.constant 16 : i32
    %223 = arith.muli %c7_i32, %c16_i32_62 : i32
    %224 = tpu.assume_multiple %223, 16 : i32
    %225 = arith.index_cast %224 : i32 to index
    %c0_63 = arith.constant 0 : index
    %226 = vector.load %arg11[%225, %c0_63] : memref<128x128xf32, #tpu.memory_space<vmem>>, vector<16x128xf32>
    %cst_64 = arith.constant dense<0.000000e+00> : vector<16x128xf32>
    %227 = tpu.matmul %220, %10, %cst_64 {dimension_numbers = #tpu.dot_dimension_numbers<[1], [0], [0], [1], [0, 0, 1, 1], [], []>} : vector<16x32xbf16>, vector<32x128xbf16>, vector<16x128xf32> -> vector<16x128xf32>
    %228 = arith.addf %226, %227 : vector<16x128xf32>
    %229 = arith.mulf %228, %8 : vector<16x128xf32>
    %230 = arith.negf %229 : vector<16x128xf32>
    %231 = math.exp %230 : vector<16x128xf32>
    %cst_65 = arith.constant 1.000000e+00 : f32
    %232 = vector.broadcast %cst_65 : f32 to vector<16x128xf32>
    %233 = arith.addf %232, %231 : vector<16x128xf32>
    %234 = arith.divf %232, %233 : vector<16x128xf32>
    %cst_66 = arith.constant 2.000000e+00 : f32
    %235 = vector.broadcast %cst_66 : f32 to vector<16x128xf32>
    %236 = arith.mulf %235, %234 : vector<16x128xf32>
    %cst_67 = arith.constant 1.000000e+00 : f32
    %237 = vector.broadcast %cst_67 : f32 to vector<16x128xf32>
    %238 = arith.subf %236, %237 : vector<16x128xf32>
    %239 = arith.select %5, %238, %234 : vector<16x128xi1>, vector<16x128xf32>
    %240 = vector.extract_strided_slice %239 {offsets = [0, 0], sizes = [16, 32], strides = [1, 1]} : vector<16x128xf32> to vector<16x32xf32>
    %241 = vector.extract_strided_slice %239 {offsets = [0, 32], sizes = [16, 32], strides = [1, 1]} : vector<16x128xf32> to vector<16x32xf32>
    %242 = vector.extract_strided_slice %239 {offsets = [0, 64], sizes = [16, 32], strides = [1, 1]} : vector<16x128xf32> to vector<16x32xf32>
    %243 = vector.extract_strided_slice %239 {offsets = [0, 96], sizes = [16, 32], strides = [1, 1]} : vector<16x128xf32> to vector<16x32xf32>
    %244 = arith.mulf %241, %217 : vector<16x32xf32>
    %245 = arith.mulf %240, %242 : vector<16x32xf32>
    %246 = arith.addf %244, %245 : vector<16x32xf32>
    %247 = math.tanh %246 : vector<16x32xf32>
    %248 = arith.mulf %243, %247 : vector<16x32xf32>
    %249 = arith.truncf %248 : vector<16x32xf32> to vector<16x32xbf16>
    %250 = arith.index_cast %224 : i32 to index
    %c0_68 = arith.constant 0 : index
    %251 = vector.load %arg12[%250, %c0_68] : memref<128x32xbf16, #tpu.memory_space<vmem>>, vector<16x32xbf16>
    tpu.vector_store %arg12[%250, %c0_68], %249 {strides = array<i32>} : memref<128x32xbf16, #tpu.memory_space<vmem>>, vector<16x32xbf16>,
    %c8_i32 = arith.constant 8 : i32
    %c0_69 = arith.constant 0 : index
    %c0_70 = arith.constant 0 : index
    %252 = vector.load %arg5[%c0_69, %c0_70] : memref<32x128xbf16, #tpu.memory_space<vmem>>, vector<32x128xbf16>
    %c0_71 = arith.constant 0 : index
    %c0_72 = arith.constant 0 : index
    %253 = vector.load %arg6[%c0_71, %c0_72] : memref<32x128xbf16, #tpu.memory_space<vmem>>, vector<32x128xbf16>
    %c0_73 = arith.constant 0 : index
    %c0_74 = arith.constant 0 : index
    %254 = vector.load %arg7[%c0_73, %c0_74] : memref<1x128xf32, #tpu.memory_space<vmem>>, vector<1x128xf32>
    %c0_75 = arith.constant 0 : index
    %c0_76 = arith.constant 0 : index
    %255 = vector.load %arg12[%c0_75, %c0_76] : memref<128x32xbf16, #tpu.memory_space<vmem>>, vector<128x32xbf16>
    %cst_77 = arith.constant dense<0.000000e+00> : vector<128x128xf32>
    %256 = tpu.matmul %255, %252, %cst_77 {dimension_numbers = #tpu.dot_dimension_numbers<[1], [0], [0], [1], [0, 0, 1, 1], [], []>} : vector<128x32xbf16>, vector<32x128xbf16>, vector<128x128xf32> -> vector<128x128xf32>
    %257 = vector.broadcast %254 : vector<1x128xf32> to vector<128x128xf32>
    %258 = arith.addf %256, %257 : vector<128x128xf32>
    %c0_78 = arith.constant 0 : index
    %c0_79 = arith.constant 0 : index
    %259 = vector.load %arg11[%c0_78, %c0_79] : memref<128x128xf32, #tpu.memory_space<vmem>>, vector<128x128xf32>
    tpu.vector_store %arg11[%c0_78, %c0_79], %258 {strides = array<i32>} : memref<128x128xf32, #tpu.memory_space<vmem>>, vector<128x128xf32>,
    %cst_80 = arith.constant 0.000000e+00 : bf16
    %260 = vector.broadcast %cst_80 : bf16 to vector<16x32xbf16>
    %cst_81 = arith.constant 0.000000e+00 : f32
    %261 = vector.broadcast %cst_81 : f32 to vector<16x32xf32>
    %c0_i32_82 = arith.constant 0 : i32
    %c16_i32_83 = arith.constant 16 : i32
    %262 = arith.muli %c0_i32_82, %c16_i32_83 : i32
    %263 = tpu.assume_multiple %262, 16 : i32
    %264 = arith.index_cast %263 : i32 to index
    %c0_84 = arith.constant 0 : index
    %265 = vector.load %arg11[%264, %c0_84] : memref<128x128xf32, #tpu.memory_space<vmem>>, vector<16x128xf32>
    %cst_85 = arith.constant dense<0.000000e+00> : vector<16x128xf32>
    %266 = tpu.matmul %260, %253, %cst_85 {dimension_numbers = #tpu.dot_dimension_numbers<[1], [0], [0], [1], [0, 0, 1, 1], [], []>} : vector<16x32xbf16>, vector<32x128xbf16>, vector<16x128xf32> -> vector<16x128xf32>
    %267 = arith.addf %265, %266 : vector<16x128xf32>
    %268 = arith.mulf %267, %8 : vector<16x128xf32>
    %269 = arith.negf %268 : vector<16x128xf32>
    %270 = math.exp %269 : vector<16x128xf32>
    %cst_86 = arith.constant 1.000000e+00 : f32
    %271 = vector.broadcast %cst_86 : f32 to vector<16x128xf32>
    %272 = arith.addf %271, %270 : vector<16x128xf32>
    %273 = arith.divf %271, %272 : vector<16x128xf32>
    %cst_87 = arith.constant 2.000000e+00 : f32
    %274 = vector.broadcast %cst_87 : f32 to vector<16x128xf32>
    %275 = arith.mulf %274, %273 : vector<16x128xf32>
    %cst_88 = arith.constant 1.000000e+00 : f32
    %276 = vector.broadcast %cst_88 : f32 to vector<16x128xf32>
    %277 = arith.subf %275, %276 : vector<16x128xf32>
    %278 = arith.select %5, %277, %273 : vector<16x128xi1>, vector<16x128xf32>
    %279 = vector.extract_strided_slice %278 {offsets = [0, 0], sizes = [16, 32], strides = [1, 1]} : vector<16x128xf32> to vector<16x32xf32>
    %280 = vector.extract_strided_slice %278 {offsets = [0, 32], sizes = [16, 32], strides = [1, 1]} : vector<16x128xf32> to vector<16x32xf32>
    %281 = vector.extract_strided_slice %278 {offsets = [0, 64], sizes = [16, 32], strides = [1, 1]} : vector<16x128xf32> to vector<16x32xf32>
    %282 = vector.extract_strided_slice %278 {offsets = [0, 96], sizes = [16, 32], strides = [1, 1]} : vector<16x128xf32> to vector<16x32xf32>
    %283 = arith.mulf %280, %261 : vector<16x32xf32>
    %284 = arith.mulf %279, %281 : vector<16x32xf32>
    %285 = arith.addf %283, %284 : vector<16x32xf32>
    %286 = math.tanh %285 : vector<16x32xf32>
    %287 = arith.mulf %282, %286 : vector<16x32xf32>
    %288 = arith.truncf %287 : vector<16x32xf32> to vector<16x32xbf16>
    %c1_i32_89 = arith.constant 1 : i32
    %c16_i32_90 = arith.constant 16 : i32
    %289 = arith.muli %c1_i32_89, %c16_i32_90 : i32
    %290 = tpu.assume_multiple %289, 16 : i32
    %291 = arith.index_cast %290 : i32 to index
    %c0_91 = arith.constant 0 : index
    %292 = vector.load %arg11[%291, %c0_91] : memref<128x128xf32, #tpu.memory_space<vmem>>, vector<16x128xf32>
    %cst_92 = arith.constant dense<0.000000e+00> : vector<16x128xf32>
    %293 = tpu.matmul %288, %253, %cst_92 {dimension_numbers = #tpu.dot_dimension_numbers<[1], [0], [0], [1], [0, 0, 1, 1], [], []>} : vector<16x32xbf16>, vector<32x128xbf16>, vector<16x128xf32> -> vector<16x128xf32>
    %294 = arith.addf %292, %293 : vector<16x128xf32>
    %295 = arith.mulf %294, %8 : vector<16x128xf32>
    %296 = arith.negf %295 : vector<16x128xf32>
    %297 = math.exp %296 : vector<16x128xf32>
    %cst_93 = arith.constant 1.000000e+00 : f32
    %298 = vector.broadcast %cst_93 : f32 to vector<16x128xf32>
    %299 = arith.addf %298, %297 : vector<16x128xf32>
    %300 = arith.divf %298, %299 : vector<16x128xf32>
    %cst_94 = arith.constant 2.000000e+00 : f32
    %301 = vector.broadcast %cst_94 : f32 to vector<16x128xf32>
    %302 = arith.mulf %301, %300 : vector<16x128xf32>
    %cst_95 = arith.constant 1.000000e+00 : f32
    %303 = vector.broadcast %cst_95 : f32 to vector<16x128xf32>
    %304 = arith.subf %302, %303 : vector<16x128xf32>
    %305 = arith.select %5, %304, %300 : vector<16x128xi1>, vector<16x128xf32>
    %306 = vector.extract_strided_slice %305 {offsets = [0, 0], sizes = [16, 32], strides = [1, 1]} : vector<16x128xf32> to vector<16x32xf32>
    %307 = vector.extract_strided_slice %305 {offsets = [0, 32], sizes = [16, 32], strides = [1, 1]} : vector<16x128xf32> to vector<16x32xf32>
    %308 = vector.extract_strided_slice %305 {offsets = [0, 64], sizes = [16, 32], strides = [1, 1]} : vector<16x128xf32> to vector<16x32xf32>
    %309 = vector.extract_strided_slice %305 {offsets = [0, 96], sizes = [16, 32], strides = [1, 1]} : vector<16x128xf32> to vector<16x32xf32>
    %310 = arith.mulf %307, %285 : vector<16x32xf32>
    %311 = arith.mulf %306, %308 : vector<16x32xf32>
    %312 = arith.addf %310, %311 : vector<16x32xf32>
    %313 = math.tanh %312 : vector<16x32xf32>
    %314 = arith.mulf %309, %313 : vector<16x32xf32>
    %315 = arith.truncf %314 : vector<16x32xf32> to vector<16x32xbf16>
    %c2_i32_96 = arith.constant 2 : i32
    %c16_i32_97 = arith.constant 16 : i32
    %316 = arith.muli %c2_i32_96, %c16_i32_97 : i32
    %317 = tpu.assume_multiple %316, 16 : i32
    %318 = arith.index_cast %317 : i32 to index
    %c0_98 = arith.constant 0 : index
    %319 = vector.load %arg11[%318, %c0_98] : memref<128x128xf32, #tpu.memory_space<vmem>>, vector<16x128xf32>
    %cst_99 = arith.constant dense<0.000000e+00> : vector<16x128xf32>
    %320 = tpu.matmul %315, %253, %cst_99 {dimension_numbers = #tpu.dot_dimension_numbers<[1], [0], [0], [1], [0, 0, 1, 1], [], []>} : vector<16x32xbf16>, vector<32x128xbf16>, vector<16x128xf32> -> vector<16x128xf32>
    %321 = arith.addf %319, %320 : vector<16x128xf32>
    %322 = arith.mulf %321, %8 : vector<16x128xf32>
    %323 = arith.negf %322 : vector<16x128xf32>
    %324 = math.exp %323 : vector<16x128xf32>
    %cst_100 = arith.constant 1.000000e+00 : f32
    %325 = vector.broadcast %cst_100 : f32 to vector<16x128xf32>
    %326 = arith.addf %325, %324 : vector<16x128xf32>
    %327 = arith.divf %325, %326 : vector<16x128xf32>
    %cst_101 = arith.constant 2.000000e+00 : f32
    %328 = vector.broadcast %cst_101 : f32 to vector<16x128xf32>
    %329 = arith.mulf %328, %327 : vector<16x128xf32>
    %cst_102 = arith.constant 1.000000e+00 : f32
    %330 = vector.broadcast %cst_102 : f32 to vector<16x128xf32>
    %331 = arith.subf %329, %330 : vector<16x128xf32>
    %332 = arith.select %5, %331, %327 : vector<16x128xi1>, vector<16x128xf32>
    %333 = vector.extract_strided_slice %332 {offsets = [0, 0], sizes = [16, 32], strides = [1, 1]} : vector<16x128xf32> to vector<16x32xf32>
    %334 = vector.extract_strided_slice %332 {offsets = [0, 32], sizes = [16, 32], strides = [1, 1]} : vector<16x128xf32> to vector<16x32xf32>
    %335 = vector.extract_strided_slice %332 {offsets = [0, 64], sizes = [16, 32], strides = [1, 1]} : vector<16x128xf32> to vector<16x32xf32>
    %336 = vector.extract_strided_slice %332 {offsets = [0, 96], sizes = [16, 32], strides = [1, 1]} : vector<16x128xf32> to vector<16x32xf32>
    %337 = arith.mulf %334, %312 : vector<16x32xf32>
    %338 = arith.mulf %333, %335 : vector<16x32xf32>
    %339 = arith.addf %337, %338 : vector<16x32xf32>
    %340 = math.tanh %339 : vector<16x32xf32>
    %341 = arith.mulf %336, %340 : vector<16x32xf32>
    %342 = arith.truncf %341 : vector<16x32xf32> to vector<16x32xbf16>
    %c3_i32_103 = arith.constant 3 : i32
    %c16_i32_104 = arith.constant 16 : i32
    %343 = arith.muli %c3_i32_103, %c16_i32_104 : i32
    %344 = tpu.assume_multiple %343, 16 : i32
    %345 = arith.index_cast %344 : i32 to index
    %c0_105 = arith.constant 0 : index
    %346 = vector.load %arg11[%345, %c0_105] : memref<128x128xf32, #tpu.memory_space<vmem>>, vector<16x128xf32>
    %cst_106 = arith.constant dense<0.000000e+00> : vector<16x128xf32>
    %347 = tpu.matmul %342, %253, %cst_106 {dimension_numbers = #tpu.dot_dimension_numbers<[1], [0], [0], [1], [0, 0, 1, 1], [], []>} : vector<16x32xbf16>, vector<32x128xbf16>, vector<16x128xf32> -> vector<16x128xf32>
    %348 = arith.addf %346, %347 : vector<16x128xf32>
    %349 = arith.mulf %348, %8 : vector<16x128xf32>
    %350 = arith.negf %349 : vector<16x128xf32>
    %351 = math.exp %350 : vector<16x128xf32>
    %cst_107 = arith.constant 1.000000e+00 : f32
    %352 = vector.broadcast %cst_107 : f32 to vector<16x128xf32>
    %353 = arith.addf %352, %351 : vector<16x128xf32>
    %354 = arith.divf %352, %353 : vector<16x128xf32>
    %cst_108 = arith.constant 2.000000e+00 : f32
    %355 = vector.broadcast %cst_108 : f32 to vector<16x128xf32>
    %356 = arith.mulf %355, %354 : vector<16x128xf32>
    %cst_109 = arith.constant 1.000000e+00 : f32
    %357 = vector.broadcast %cst_109 : f32 to vector<16x128xf32>
    %358 = arith.subf %356, %357 : vector<16x128xf32>
    %359 = arith.select %5, %358, %354 : vector<16x128xi1>, vector<16x128xf32>
    %360 = vector.extract_strided_slice %359 {offsets = [0, 0], sizes = [16, 32], strides = [1, 1]} : vector<16x128xf32> to vector<16x32xf32>
    %361 = vector.extract_strided_slice %359 {offsets = [0, 32], sizes = [16, 32], strides = [1, 1]} : vector<16x128xf32> to vector<16x32xf32>
    %362 = vector.extract_strided_slice %359 {offsets = [0, 64], sizes = [16, 32], strides = [1, 1]} : vector<16x128xf32> to vector<16x32xf32>
    %363 = vector.extract_strided_slice %359 {offsets = [0, 96], sizes = [16, 32], strides = [1, 1]} : vector<16x128xf32> to vector<16x32xf32>
    %364 = arith.mulf %361, %339 : vector<16x32xf32>
    %365 = arith.mulf %360, %362 : vector<16x32xf32>
    %366 = arith.addf %364, %365 : vector<16x32xf32>
    %367 = math.tanh %366 : vector<16x32xf32>
    %368 = arith.mulf %363, %367 : vector<16x32xf32>
    %369 = arith.truncf %368 : vector<16x32xf32> to vector<16x32xbf16>
    %c4_i32_110 = arith.constant 4 : i32
    %c16_i32_111 = arith.constant 16 : i32
    %370 = arith.muli %c4_i32_110, %c16_i32_111 : i32
    %371 = tpu.assume_multiple %370, 16 : i32
    %372 = arith.index_cast %371 : i32 to index
    %c0_112 = arith.constant 0 : index
    %373 = vector.load %arg11[%372, %c0_112] : memref<128x128xf32, #tpu.memory_space<vmem>>, vector<16x128xf32>
    %cst_113 = arith.constant dense<0.000000e+00> : vector<16x128xf32>
    %374 = tpu.matmul %369, %253, %cst_113 {dimension_numbers = #tpu.dot_dimension_numbers<[1], [0], [0], [1], [0, 0, 1, 1], [], []>} : vector<16x32xbf16>, vector<32x128xbf16>, vector<16x128xf32> -> vector<16x128xf32>
    %375 = arith.addf %373, %374 : vector<16x128xf32>
    %376 = arith.mulf %375, %8 : vector<16x128xf32>
    %377 = arith.negf %376 : vector<16x128xf32>
    %378 = math.exp %377 : vector<16x128xf32>
    %cst_114 = arith.constant 1.000000e+00 : f32
    %379 = vector.broadcast %cst_114 : f32 to vector<16x128xf32>
    %380 = arith.addf %379, %378 : vector<16x128xf32>
    %381 = arith.divf %379, %380 : vector<16x128xf32>
    %cst_115 = arith.constant 2.000000e+00 : f32
    %382 = vector.broadcast %cst_115 : f32 to vector<16x128xf32>
    %383 = arith.mulf %382, %381 : vector<16x128xf32>
    %cst_116 = arith.constant 1.000000e+00 : f32
    %384 = vector.broadcast %cst_116 : f32 to vector<16x128xf32>
    %385 = arith.subf %383, %384 : vector<16x128xf32>
    %386 = arith.select %5, %385, %381 : vector<16x128xi1>, vector<16x128xf32>
    %387 = vector.extract_strided_slice %386 {offsets = [0, 0], sizes = [16, 32], strides = [1, 1]} : vector<16x128xf32> to vector<16x32xf32>
    %388 = vector.extract_strided_slice %386 {offsets = [0, 32], sizes = [16, 32], strides = [1, 1]} : vector<16x128xf32> to vector<16x32xf32>
    %389 = vector.extract_strided_slice %386 {offsets = [0, 64], sizes = [16, 32], strides = [1, 1]} : vector<16x128xf32> to vector<16x32xf32>
    %390 = vector.extract_strided_slice %386 {offsets = [0, 96], sizes = [16, 32], strides = [1, 1]} : vector<16x128xf32> to vector<16x32xf32>
    %391 = arith.mulf %388, %366 : vector<16x32xf32>
    %392 = arith.mulf %387, %389 : vector<16x32xf32>
    %393 = arith.addf %391, %392 : vector<16x32xf32>
    %394 = math.tanh %393 : vector<16x32xf32>
    %395 = arith.mulf %390, %394 : vector<16x32xf32>
    %396 = arith.truncf %395 : vector<16x32xf32> to vector<16x32xbf16>
    %c5_i32_117 = arith.constant 5 : i32
    %c16_i32_118 = arith.constant 16 : i32
    %397 = arith.muli %c5_i32_117, %c16_i32_118 : i32
    %398 = tpu.assume_multiple %397, 16 : i32
    %399 = arith.index_cast %398 : i32 to index
    %c0_119 = arith.constant 0 : index
    %400 = vector.load %arg11[%399, %c0_119] : memref<128x128xf32, #tpu.memory_space<vmem>>, vector<16x128xf32>
    %cst_120 = arith.constant dense<0.000000e+00> : vector<16x128xf32>
    %401 = tpu.matmul %396, %253, %cst_120 {dimension_numbers = #tpu.dot_dimension_numbers<[1], [0], [0], [1], [0, 0, 1, 1], [], []>} : vector<16x32xbf16>, vector<32x128xbf16>, vector<16x128xf32> -> vector<16x128xf32>
    %402 = arith.addf %400, %401 : vector<16x128xf32>
    %403 = arith.mulf %402, %8 : vector<16x128xf32>
    %404 = arith.negf %403 : vector<16x128xf32>
    %405 = math.exp %404 : vector<16x128xf32>
    %cst_121 = arith.constant 1.000000e+00 : f32
    %406 = vector.broadcast %cst_121 : f32 to vector<16x128xf32>
    %407 = arith.addf %406, %405 : vector<16x128xf32>
    %408 = arith.divf %406, %407 : vector<16x128xf32>
    %cst_122 = arith.constant 2.000000e+00 : f32
    %409 = vector.broadcast %cst_122 : f32 to vector<16x128xf32>
    %410 = arith.mulf %409, %408 : vector<16x128xf32>
    %cst_123 = arith.constant 1.000000e+00 : f32
    %411 = vector.broadcast %cst_123 : f32 to vector<16x128xf32>
    %412 = arith.subf %410, %411 : vector<16x128xf32>
    %413 = arith.select %5, %412, %408 : vector<16x128xi1>, vector<16x128xf32>
    %414 = vector.extract_strided_slice %413 {offsets = [0, 0], sizes = [16, 32], strides = [1, 1]} : vector<16x128xf32> to vector<16x32xf32>
    %415 = vector.extract_strided_slice %413 {offsets = [0, 32], sizes = [16, 32], strides = [1, 1]} : vector<16x128xf32> to vector<16x32xf32>
    %416 = vector.extract_strided_slice %413 {offsets = [0, 64], sizes = [16, 32], strides = [1, 1]} : vector<16x128xf32> to vector<16x32xf32>
    %417 = vector.extract_strided_slice %413 {offsets = [0, 96], sizes = [16, 32], strides = [1, 1]} : vector<16x128xf32> to vector<16x32xf32>
    %418 = arith.mulf %415, %393 : vector<16x32xf32>
    %419 = arith.mulf %414, %416 : vector<16x32xf32>
    %420 = arith.addf %418, %419 : vector<16x32xf32>
    %421 = math.tanh %420 : vector<16x32xf32>
    %422 = arith.mulf %417, %421 : vector<16x32xf32>
    %423 = arith.truncf %422 : vector<16x32xf32> to vector<16x32xbf16>
    %c6_i32_124 = arith.constant 6 : i32
    %c16_i32_125 = arith.constant 16 : i32
    %424 = arith.muli %c6_i32_124, %c16_i32_125 : i32
    %425 = tpu.assume_multiple %424, 16 : i32
    %426 = arith.index_cast %425 : i32 to index
    %c0_126 = arith.constant 0 : index
    %427 = vector.load %arg11[%426, %c0_126] : memref<128x128xf32, #tpu.memory_space<vmem>>, vector<16x128xf32>
    %cst_127 = arith.constant dense<0.000000e+00> : vector<16x128xf32>
    %428 = tpu.matmul %423, %253, %cst_127 {dimension_numbers = #tpu.dot_dimension_numbers<[1], [0], [0], [1], [0, 0, 1, 1], [], []>} : vector<16x32xbf16>, vector<32x128xbf16>, vector<16x128xf32> -> vector<16x128xf32>
    %429 = arith.addf %427, %428 : vector<16x128xf32>
    %430 = arith.mulf %429, %8 : vector<16x128xf32>
    %431 = arith.negf %430 : vector<16x128xf32>
    %432 = math.exp %431 : vector<16x128xf32>
    %cst_128 = arith.constant 1.000000e+00 : f32
    %433 = vector.broadcast %cst_128 : f32 to vector<16x128xf32>
    %434 = arith.addf %433, %432 : vector<16x128xf32>
    %435 = arith.divf %433, %434 : vector<16x128xf32>
    %cst_129 = arith.constant 2.000000e+00 : f32
    %436 = vector.broadcast %cst_129 : f32 to vector<16x128xf32>
    %437 = arith.mulf %436, %435 : vector<16x128xf32>
    %cst_130 = arith.constant 1.000000e+00 : f32
    %438 = vector.broadcast %cst_130 : f32 to vector<16x128xf32>
    %439 = arith.subf %437, %438 : vector<16x128xf32>
    %440 = arith.select %5, %439, %435 : vector<16x128xi1>, vector<16x128xf32>
    %441 = vector.extract_strided_slice %440 {offsets = [0, 0], sizes = [16, 32], strides = [1, 1]} : vector<16x128xf32> to vector<16x32xf32>
    %442 = vector.extract_strided_slice %440 {offsets = [0, 32], sizes = [16, 32], strides = [1, 1]} : vector<16x128xf32> to vector<16x32xf32>
    %443 = vector.extract_strided_slice %440 {offsets = [0, 64], sizes = [16, 32], strides = [1, 1]} : vector<16x128xf32> to vector<16x32xf32>
    %444 = vector.extract_strided_slice %440 {offsets = [0, 96], sizes = [16, 32], strides = [1, 1]} : vector<16x128xf32> to vector<16x32xf32>
    %445 = arith.mulf %442, %420 : vector<16x32xf32>
    %446 = arith.mulf %441, %443 : vector<16x32xf32>
    %447 = arith.addf %445, %446 : vector<16x32xf32>
    %448 = math.tanh %447 : vector<16x32xf32>
    %449 = arith.mulf %444, %448 : vector<16x32xf32>
    %450 = arith.truncf %449 : vector<16x32xf32> to vector<16x32xbf16>
    %c7_i32_131 = arith.constant 7 : i32
    %c16_i32_132 = arith.constant 16 : i32
    %451 = arith.muli %c7_i32_131, %c16_i32_132 : i32
    %452 = tpu.assume_multiple %451, 16 : i32
    %453 = arith.index_cast %452 : i32 to index
    %c0_133 = arith.constant 0 : index
    %454 = vector.load %arg11[%453, %c0_133] : memref<128x128xf32, #tpu.memory_space<vmem>>, vector<16x128xf32>
    %cst_134 = arith.constant dense<0.000000e+00> : vector<16x128xf32>
    %455 = tpu.matmul %450, %253, %cst_134 {dimension_numbers = #tpu.dot_dimension_numbers<[1], [0], [0], [1], [0, 0, 1, 1], [], []>} : vector<16x32xbf16>, vector<32x128xbf16>, vector<16x128xf32> -> vector<16x128xf32>
    %456 = arith.addf %454, %455 : vector<16x128xf32>
    %457 = arith.mulf %456, %8 : vector<16x128xf32>
    %458 = arith.negf %457 : vector<16x128xf32>
    %459 = math.exp %458 : vector<16x128xf32>
    %cst_135 = arith.constant 1.000000e+00 : f32
    %460 = vector.broadcast %cst_135 : f32 to vector<16x128xf32>
    %461 = arith.addf %460, %459 : vector<16x128xf32>
    %462 = arith.divf %460, %461 : vector<16x128xf32>
    %cst_136 = arith.constant 2.000000e+00 : f32
    %463 = vector.broadcast %cst_136 : f32 to vector<16x128xf32>
    %464 = arith.mulf %463, %462 : vector<16x128xf32>
    %cst_137 = arith.constant 1.000000e+00 : f32
    %465 = vector.broadcast %cst_137 : f32 to vector<16x128xf32>
    %466 = arith.subf %464, %465 : vector<16x128xf32>
    %467 = arith.select %5, %466, %462 : vector<16x128xi1>, vector<16x128xf32>
    %468 = vector.extract_strided_slice %467 {offsets = [0, 0], sizes = [16, 32], strides = [1, 1]} : vector<16x128xf32> to vector<16x32xf32>
    %469 = vector.extract_strided_slice %467 {offsets = [0, 32], sizes = [16, 32], strides = [1, 1]} : vector<16x128xf32> to vector<16x32xf32>
    %470 = vector.extract_strided_slice %467 {offsets = [0, 64], sizes = [16, 32], strides = [1, 1]} : vector<16x128xf32> to vector<16x32xf32>
    %471 = vector.extract_strided_slice %467 {offsets = [0, 96], sizes = [16, 32], strides = [1, 1]} : vector<16x128xf32> to vector<16x32xf32>
    %472 = arith.mulf %469, %447 : vector<16x32xf32>
    %473 = arith.mulf %468, %470 : vector<16x32xf32>
    %474 = arith.addf %472, %473 : vector<16x32xf32>
    %475 = math.tanh %474 : vector<16x32xf32>
    %476 = arith.mulf %471, %475 : vector<16x32xf32>
    %477 = arith.truncf %476 : vector<16x32xf32> to vector<16x32xbf16>
    %c8_i32_138 = arith.constant 8 : i32
    %c0_139 = arith.constant 0 : index
    %c0_140 = arith.constant 0 : index
    %478 = vector.load %arg8[%c0_139, %c0_140] : memref<32x8xbf16, #tpu.memory_space<vmem>>, vector<32x8xbf16>
    %cst_141 = arith.constant dense<0.000000e+00> : vector<16x8xf32>
    %479 = tpu.matmul %477, %478, %cst_141 {dimension_numbers = #tpu.dot_dimension_numbers<[1], [0], [0], [1], [0, 0, 1, 1], [], []>} : vector<16x32xbf16>, vector<32x8xbf16>, vector<16x8xf32> -> vector<16x8xf32>
    %c0_142 = arith.constant 0 : index
    %c0_143 = arith.constant 0 : index
    %480 = vector.load %arg9[%c0_142, %c0_143] : memref<1x8xf32, #tpu.memory_space<vmem>>, vector<1x8xf32>
    %481 = vector.broadcast %480 : vector<1x8xf32> to vector<16x8xf32>
    %482 = arith.addf %479, %481 : vector<16x8xf32>
    %c0_144 = arith.constant 0 : index
    %c0_145 = arith.constant 0 : index
    %483 = vector.load %arg10[%c0_144, %c0_145] : memref<16x8xf32, #tpu.memory_space<vmem>>, vector<16x8xf32>
    tpu.vector_store %arg10[%c0_144, %c0_145], %482 {strides = array<i32>} : memref<16x8xf32, #tpu.memory_space<vmem>>, vector<16x8xf32>,
    return
  }
  func.func @transform_0(%arg0: i32) -> (i32, i32, i32) {
    %c0_i32 = arith.constant 0 : i32
    %c0_i32_0 = arith.constant 0 : i32
    %c0_i32_1 = arith.constant 0 : i32
    return %c0_i32, %arg0, %c0_i32_0 : i32, i32, i32
  }
  func.func @transform_1(%arg0: i32) -> (i32, i32) {
    %c0_i32 = arith.constant 0 : i32
    %c0_i32_0 = arith.constant 0 : i32
    %c0_i32_1 = arith.constant 0 : i32
    return %c0_i32, %c0_i32_0 : i32, i32
  }
  func.func @transform_2(%arg0: i32) -> (i32, i32) {
    %c0_i32 = arith.constant 0 : i32
    %c0_i32_0 = arith.constant 0 : i32
    %c0_i32_1 = arith.constant 0 : i32
    return %c0_i32, %c0_i32_0 : i32, i32
  }
  func.func @transform_3(%arg0: i32) -> (i32, i32) {
    %c0_i32 = arith.constant 0 : i32
    %c0_i32_0 = arith.constant 0 : i32
    %c0_i32_1 = arith.constant 0 : i32
    return %c0_i32, %c0_i32_0 : i32, i32
  }
  func.func @transform_4(%arg0: i32) -> (i32, i32) {
    %c0_i32 = arith.constant 0 : i32
    %c0_i32_0 = arith.constant 0 : i32
    %c0_i32_1 = arith.constant 0 : i32
    return %c0_i32, %c0_i32_0 : i32, i32
  }
  func.func @transform_5(%arg0: i32) -> (i32, i32) {
    %c0_i32 = arith.constant 0 : i32
    %c0_i32_0 = arith.constant 0 : i32
    %c0_i32_1 = arith.constant 0 : i32
    return %c0_i32, %c0_i32_0 : i32, i32
  }
  func.func @transform_6(%arg0: i32) -> (i32, i32) {
    %c0_i32 = arith.constant 0 : i32
    %c0_i32_0 = arith.constant 0 : i32
    %c0_i32_1 = arith.constant 0 : i32
    return %c0_i32, %c0_i32_0 : i32, i32
  }
  func.func @transform_7(%arg0: i32) -> (i32, i32) {
    %c0_i32 = arith.constant 0 : i32
    %c0_i32_0 = arith.constant 0 : i32
    %c0_i32_1 = arith.constant 0 : i32
    return %c0_i32, %c0_i32_0 : i32, i32
  }
  func.func @transform_8(%arg0: i32) -> (i32, i32) {
    %c0_i32 = arith.constant 0 : i32
    %c0_i32_0 = arith.constant 0 : i32
    %c0_i32_1 = arith.constant 0 : i32
    return %c0_i32, %c0_i32_0 : i32, i32
  }
  func.func @transform_9(%arg0: i32) -> (i32, i32) {
    %c0_i32 = arith.constant 0 : i32
    %c0_i32_0 = arith.constant 0 : i32
    return %arg0, %c0_i32 : i32, i32
  }
}

</mosaic_0001>

<llo_original>
// kernel: tpu_custom_call.1
$region0: #{tpu_custom_call.1}
  #allocation0 [shape = 'u32[]', space=smem, size = 0x4, offset = 0x4, fixed_abs, tag = 'smem constant byte address 0x4 - core index']
  #allocation1 [shape = 'u32[144,128]{1,0:T(1,128)}', space=vmem, size = 0x12000, scoped, tag = 'internal scratch']
  #allocation2 [shape = 'f32[128,128]{1,0:T(8,128)}', space=vmem, size = 0x10000, scoped, tag = 'scratch operand']
  #allocation3 [shape = 'bf16[128,32]{1,0:T(16,128)(2,1)}', space=vmem, size = 0x8000, scoped, tag = 'scratch operand']
  %s0 = inlined_call_operand.hbm [shape: bf16[8,16,16], index: 0, kind: input, shape index: {}]
  %s1 = inlined_call_operand.hbm [shape: bf16[16,128], index: 1, kind: input, shape index: {}]
  %s2 = inlined_call_operand.vmem [shape: bf16[32,128], index: 2, kind: input, shape index: {}]
  %s3 = inlined_call_operand.vmem [shape: f32[1,128], index: 3, kind: input, shape index: {}]
  %s4 = inlined_call_operand.vmem [shape: bf16[32,128], index: 4, kind: input, shape index: {}]
  %s5 = inlined_call_operand.hbm [shape: bf16[32,128], index: 5, kind: input, shape index: {}]
  %s6 = inlined_call_operand.vmem [shape: f32[1,128], index: 6, kind: input, shape index: {}]
  %s7 = inlined_call_operand.vmem [shape: bf16[32,8], index: 7, kind: input, shape index: {}]
  %s8 = inlined_call_operand.vmem [shape: f32[1,8], index: 8, kind: input, shape index: {}]
  %s9 = inlined_call_operand.vmem [shape: f32[16,8], index: 9, kind: output, shape index: {}]
  %s10 = sld [smem:[#allocation0]]
  $region58: #{tpu_custom_call.1} parent=0
    _
  %s12 = ssub.s32 1, %s10
  %s13 = scalar_select 0, %s12, %s10
  $region1: #{tpu_custom_call.1} parent=0
    #allocation4 [shape = 'u8[32768]{0}', space=vmem, size = 0x8000, scoped, tag = 'input window, operand 0, single buffered']
    #allocation5 [shape = 's32[1]{0}', space=sflag, size = 0x4, scoped, tag = 'scoped memory for tpu_custom_call.1']
    #allocation6 [shape = 'u8[4096]{0}', space=vmem, size = 0x1000, scoped, tag = 'input window, operand 1, single buffered']
    #allocation7 [shape = 's32[1]{0}', space=sflag, size = 0x4, scoped, tag = 'scoped memory for tpu_custom_call.1']
    #allocation8 [shape = 'u8[8192]{0}', space=vmem, size = 0x2000, scoped, tag = 'input window, operand 5, single buffered']
    %14 = vsyncpa [#allocation5], 0
    %15 = vsyncpa [#allocation7], 0
    // Predicated region
    $region2: #{tpu_custom_call.1} parent=1 // pred_check
      _
    $region3: #{tpu_custom_call.1} parent=1 // pred_check_branch
      %17 = sbr.rel (0) target = $region5
    $region4: #{tpu_custom_call.1} parent=1 // pred_region
      %s19 = ssub.s32 1024, 1024
      %20 = vsyncadd [#allocation5], %s19
      %s21 = sshll.u32 [#allocation4], 4
      %s22 = int_to_ptr.vmem [resolvable:$true] %s21
      %27 = dma.hbm_to_vmem [thread:$0]  %s0, 1024, %s22, [#allocation5], 64, 64, 4
    $region5: #{tpu_custom_call.1} parent=1 // pred_fallthru
      _
    // Predicated region
    $region6: #{tpu_custom_call.1} parent=1 // pred_check
      _
    $region7: #{tpu_custom_call.1} parent=1 // pred_check_branch
      %29 = sbr.rel (0) target = $region9
    $region8: #{tpu_custom_call.1} parent=1 // pred_region
      %s31 = ssub.s32 128, 128
      %32 = vsyncadd [#allocation7], %s31
      %s33 = sshll.u32 [#allocation6], 4
      %s34 = int_to_ptr.vmem [resolvable:$true] %s33
      %39 = dma.hbm_to_vmem [thread:$0]  %s1, 128, %s34, [#allocation7], 64, 64, 4
    $region9: #{tpu_custom_call.1} parent=1 // pred_fallthru
      _
    // Predicated region
    $region10: #{tpu_custom_call.1} parent=1 // pred_check
      _
    $region11: #{tpu_custom_call.1} parent=1 // pred_check_branch
      %41 = sbr.rel (0) target = $region13
    $region12: #{tpu_custom_call.1} parent=1 // pred_region
      _
    $region13: #{tpu_custom_call.1} parent=1 // pred_fallthru
      _
    // Predicated region
    $region14: #{tpu_custom_call.1} parent=1 // pred_check
      _
    $region15: #{tpu_custom_call.1} parent=1 // pred_check_branch
      %43 = sbr.rel (0) target = $region17
    $region16: #{tpu_custom_call.1} parent=1 // pred_region
      _
    $region17: #{tpu_custom_call.1} parent=1 // pred_fallthru
      _
    // Predicated region
    $region18: #{tpu_custom_call.1} parent=1 // pred_check
      _
    $region19: #{tpu_custom_call.1} parent=1 // pred_check_branch
      %45 = sbr.rel (0) target = $region21
    $region20: #{tpu_custom_call.1} parent=1 // pred_region
      _
    $region21: #{tpu_custom_call.1} parent=1 // pred_fallthru
      _
    // Predicated region
    $region22: #{tpu_custom_call.1} parent=1 // pred_check
      _
    $region23: #{tpu_custom_call.1} parent=1 // pred_check_branch
      %47 = sbr.rel (0) target = $region25
    $region24: #{tpu_custom_call.1} parent=1 // pred_region
      %s49 = ssub.s32 256, 256
      %50 = vsyncadd [#allocation7], %s49
      %s51 = sshll.u32 [#allocation8], 4
      %s52 = int_to_ptr.vmem [resolvable:$true] %s51
      %57 = dma.hbm_to_vmem [thread:$0]  %s5, 256, %s52, [#allocation7], 64, 64, 4
    $region25: #{tpu_custom_call.1} parent=1 // pred_fallthru
      _
    // Predicated region
    $region26: #{tpu_custom_call.1} parent=1 // pred_check
      _
    $region27: #{tpu_custom_call.1} parent=1 // pred_check_branch
      %59 = sbr.rel (0) target = $region29
    $region28: #{tpu_custom_call.1} parent=1 // pred_region
      _
    $region29: #{tpu_custom_call.1} parent=1 // pred_fallthru
      _
    // Predicated region
    $region30: #{tpu_custom_call.1} parent=1 // pred_check
      _
    $region31: #{tpu_custom_call.1} parent=1 // pred_check_branch
      %61 = sbr.rel (0) target = $region33
    $region32: #{tpu_custom_call.1} parent=1 // pred_region
      _
    $region33: #{tpu_custom_call.1} parent=1 // pred_fallthru
      _
    // Predicated region
    $region34: #{tpu_custom_call.1} parent=1 // pred_check
      _
    $region35: #{tpu_custom_call.1} parent=1 // pred_check_branch
      %63 = sbr.rel (0) target = $region37
    $region36: #{tpu_custom_call.1} parent=1 // pred_region
      _
    $region37: #{tpu_custom_call.1} parent=1 // pred_fallthru
      _
    // Predicated region
    $region38: #{tpu_custom_call.1} parent=1 // pred_check
      _
    $region39: #{tpu_custom_call.1} parent=1 // pred_check_branch
      %65 = sbr.rel (0) target = $region41
    $region40: #{tpu_custom_call.1} parent=1 // pred_region
      %66 = dma.done [#allocation5], 1024
    $region41: #{tpu_custom_call.1} parent=1 // pred_fallthru
      _
    // Predicated region
    $region42: #{tpu_custom_call.1} parent=1 // pred_check
      _
    $region43: #{tpu_custom_call.1} parent=1 // pred_check_branch
      %68 = sbr.rel (0) target = $region45
    $region44: #{tpu_custom_call.1} parent=1 // pred_region
      %69 = dma.done [#allocation7], 128
    $region45: #{tpu_custom_call.1} parent=1 // pred_fallthru
      _
    // Predicated region
    $region46: #{tpu_custom_call.1} parent=1 // pred_check
      _
    $region47: #{tpu_custom_call.1} parent=1 // pred_check_branch
      %71 = sbr.rel (0) target = $region49
    $region48: #{tpu_custom_call.1} parent=1 // pred_region
      %72 = dma.done [#allocation7], 256
    $region49: #{tpu_custom_call.1} parent=1 // pred_fallthru
      _
    %v74 = vlaneseq
    %v75 = vand.u32 %v74, 127
    %vm76 = vcmp.ge.s32.totalorder %v75, 64
    %vm77 = vcmp.lt.s32.totalorder %v75, 96
    %vm78 = vmand %vm76, %vm77
    %v79 = vsel %vm78, 2.0, 1.0
    %v80 = vld [vmem:[#allocation6] sm:$0xf]
    %v81 = vld [vmem:[#allocation6 + $0x4] sm:$0xf]
    %v82 = vld [vmem:[%s2] sm:$0xf]
    %v83 = vld [vmem:[%s2 + $0x4] sm:$0xf]
    %v84 = vld [vmem:[%s2 + $0x8] sm:$0xf]
    %v85 = vld [vmem:[%s2 + $0xc] sm:$0xf]
    %v86 = vld [vmem:[%s3] sm:$0x1]
    %v87 = vld [vmem:[#allocation4] sm:$0xf]
    %v88 = vld [vmem:[#allocation4 + $0x4] sm:$0xf]
    %v89 = vld [vmem:[#allocation4 + $0x8] sm:$0xf]
    %v90 = vld [vmem:[#allocation4 + $0xc] sm:$0xf]
    %v91 = vld [vmem:[#allocation4 + $0x10] sm:$0xf]
    %v92 = vld [vmem:[#allocation4 + $0x14] sm:$0xf]
    %v93 = vld [vmem:[#allocation4 + $0x18] sm:$0xf]
    %v94 = vld [vmem:[#allocation4 + $0x1c] sm:$0xf]
    %v95 = vld [vmem:[#allocation4 + $0x20] sm:$0xf]
    %v96 = vld [vmem:[#allocation4 + $0x24] sm:$0xf]
    %v97 = vld [vmem:[#allocation4 + $0x28] sm:$0xf]
    %v98 = vld [vmem:[#allocation4 + $0x2c] sm:$0xf]
    %v99 = vld [vmem:[#allocation4 + $0x30] sm:$0xf]
    %v100 = vld [vmem:[#allocation4 + $0x34] sm:$0xf]
    %v101 = vld [vmem:[#allocation4 + $0x38] sm:$0xf]
    %v102 = vld [vmem:[#allocation4 + $0x3c] sm:$0xf]
    %v104 = vlaneseq
    %v105 = vshrl.u32 %v104, 7
    %v106 = vsub.s32 0, %v105
    %v107 = vrot.slane %v86, %v106
    %v125 = vunpack.c.l.b16 %v87
    %v126 = vunpack.c.l.b16 %v88
    %v127 = vunpack.c.l.b16 %v89
    %v128 = vunpack.c.l.b16 %v90
    %v129 = vunpack.c.l.b16 %v91
    %v130 = vunpack.c.l.b16 %v92
    %v131 = vunpack.c.l.b16 %v93
    %v132 = vunpack.c.l.b16 %v94
    %v133 = vunpack.c.l.b16 %v95
    %v134 = vunpack.c.l.b16 %v96
    %v135 = vunpack.c.l.b16 %v97
    %v136 = vunpack.c.l.b16 %v98
    %v137 = vunpack.c.l.b16 %v99
    %v138 = vunpack.c.l.b16 %v100
    %v139 = vunpack.c.l.b16 %v101
    %v140 = vunpack.c.l.b16 %v102
    %v141 = vpack.c.b16 %v126, %v125
    %v142 = vpack.c.b16 %v128, %v127
    %v143 = vpack.c.b16 %v130, %v129
    %v144 = vpack.c.b16 %v132, %v131
    %v145 = vpack.c.b16 %v134, %v133
    %v146 = vpack.c.b16 %v136, %v135
    %v147 = vpack.c.b16 %v138, %v137
    %v148 = vpack.c.b16 %v140, %v139
    %v151 = vunpack.c.l.b16 %v80
    %v152 = vunpack.c.l.b16 %v81
    %v153 = vpack.c.b16 %v152, %v151
    %vm155 = vcmask 130048
    %v157 = vsel %vm155, %v141, 0
    %v160 = vsel %vm155, %v142, 0
    %v163 = vsel %vm155, %v143, 0
    %v166 = vsel %vm155, %v144, 0
    %v169 = vsel %vm155, %v145, 0
    %v172 = vsel %vm155, %v146, 0
    %v175 = vsel %vm155, %v147, 0
    %v178 = vsel %vm155, %v148, 0
    %180 = vmatprep.subr.bf16.mxu0 0
    %181 = vmatpush1.bf16.msra.mxu0 %v153
    %182 = vmatprep.subr.bf16.mxu0 0
    %183 = vmatpush1.bf16.msra.mxu0 0
    %184 = vmatprep.subr.bf16.mxu0 0
    %185 = vmatpush1.bf16.msra.mxu0 0
    %186 = vmatprep.subr.bf16.mxu0 0
    %187 = vmatpush1.bf16.msra.mxu0 0
    %188 = vmatprep.subr.bf16.mxu0 0
    %189 = vmatpush1.bf16.msra.mxu0 0
    %190 = vmatprep.subr.bf16.mxu0 0
    %191 = vmatpush1.bf16.msra.mxu0 0
    %192 = vmatprep.subr.bf16.mxu0 0
    %193 = vmatpush1.bf16.msra.mxu0 0
    %194 = vmatprep.subr.bf16.mxu0 0
    %195 = vmatpush1.bf16.msra.mxu0 0
    %196 = vmatprep.subr.bf16.mxu0 0
    %197 = vmatpush1.bf16.msra.mxu0 0
    %198 = vmatprep.subr.bf16.mxu0 0
    %199 = vmatpush1.bf16.msra.mxu0 0
    %200 = vmatprep.subr.bf16.mxu0 0
    %201 = vmatpush1.bf16.msra.mxu0 0
    %202 = vmatprep.subr.bf16.mxu0 0
    %203 = vmatpush1.bf16.msra.mxu0 0
    %204 = vmatprep.subr.bf16.mxu0 0
    %205 = vmatpush1.bf16.msra.mxu0 0
    %206 = vmatprep.subr.bf16.mxu0 0
    %207 = vmatpush1.bf16.msra.mxu0 0
    %208 = vmatprep.subr.bf16.mxu0 0
    %209 = vmatpush1.bf16.msra.mxu0 0
    %210 = vmatprep.subr.bf16.mxu0 0
    %211 = vmatpush1.bf16.msra.mxu0 0
    %212 = vmatprep.mubr.bf16.mxu0 0
    %213 = vmatmul.mubr.bf16.gmra.mrb[0].mxu0 %v157
    %v214 = vpop.f32.mrb[0].mxu0
    %v215 = vadd.f32 %v107, %v214
    %v216 = vpop.f32.mrb[0].mxu0
    %v217 = vpop.f32.mrb[0].mxu0
    %v218 = vadd.f32 %v107, %v217
    %v219 = vpop.f32.mrb[0].mxu0
    %220 = vmatprep.mubr.bf16.mxu0 0
    %221 = vmatmul.mubr.bf16.gmra.mrb[0].mxu0 %v160
    %v222 = vpop.f32.mrb[0].mxu0
    %v223 = vadd.f32 %v107, %v222
    %v224 = vpop.f32.mrb[0].mxu0
    %v225 = vpop.f32.mrb[0].mxu0
    %v226 = vadd.f32 %v107, %v225
    %v227 = vpop.f32.mrb[0].mxu0
    %228 = vmatprep.mubr.bf16.mxu0 0
    %229 = vmatmul.mubr.bf16.gmra.mrb[0].mxu0 %v163
    %v230 = vpop.f32.mrb[0].mxu0
    %v231 = vadd.f32 %v107, %v230
    %v232 = vpop.f32.mrb[0].mxu0
    %v233 = vpop.f32.mrb[0].mxu0
    %v234 = vadd.f32 %v107, %v233
    %v235 = vpop.f32.mrb[0].mxu0
    %236 = vmatprep.mubr.bf16.mxu0 0
    %237 = vmatmul.mubr.bf16.gmra.mrb[0].mxu0 %v166
    %v238 = vpop.f32.mrb[0].mxu0
    %v239 = vadd.f32 %v107, %v238
    %v240 = vpop.f32.mrb[0].mxu0
    %v241 = vpop.f32.mrb[0].mxu0
    %v242 = vadd.f32 %v107, %v241
    %v243 = vpop.f32.mrb[0].mxu0
    %244 = vmatprep.mubr.bf16.mxu0 0
    %245 = vmatmul.mubr.bf16.gmra.mrb[0].mxu0 %v169
    %v246 = vpop.f32.mrb[0].mxu0
    %v247 = vadd.f32 %v107, %v246
    %v248 = vpop.f32.mrb[0].mxu0
    %v249 = vpop.f32.mrb[0].mxu0
    %v250 = vadd.f32 %v107, %v249
    %v251 = vpop.f32.mrb[0].mxu0
    %252 = vmatprep.mubr.bf16.mxu0 0
    %253 = vmatmul.mubr.bf16.gmra.mrb[0].mxu0 %v172
    %v254 = vpop.f32.mrb[0].mxu0
    %v255 = vadd.f32 %v107, %v254
    %v256 = vpop.f32.mrb[0].mxu0
    %v257 = vpop.f32.mrb[0].mxu0
    %v258 = vadd.f32 %v107, %v257
    %v259 = vpop.f32.mrb[0].mxu0
    %260 = vmatprep.mubr.bf16.mxu0 0
    %261 = vmatmul.mubr.bf16.gmra.mrb[0].mxu0 %v175
    %v262 = vpop.f32.mrb[0].mxu0
    %v263 = vadd.f32 %v107, %v262
    %v264 = vpop.f32.mrb[0].mxu0
    %v265 = vpop.f32.mrb[0].mxu0
    %v266 = vadd.f32 %v107, %v265
    %v267 = vpop.f32.mrb[0].mxu0
    %268 = vmatprep.mubr.bf16.mxu0 0
    %269 = vmatmul.mubr.bf16.gmra.mrb[0].mxu0 %v178
    %v270 = vpop.f32.mrb[0].mxu0
    %v271 = vadd.f32 %v107, %v270
    %v272 = vpop.f32.mrb[0].mxu0
    %v273 = vpop.f32.mrb[0].mxu0
    %v274 = vadd.f32 %v107, %v273
    %v275 = vpop.f32.mrb[0].mxu0
    %276 = vdwg.mxu0
    %277 = vst [vmem:[#allocation2] sm:$0xff] %v215
    %278 = vst [vmem:[#allocation2 + $0x8] sm:$0xff] %v218
    %279 = vst [vmem:[#allocation2 + $0x10] sm:$0xff] %v223
    %280 = vst [vmem:[#allocation2 + $0x18] sm:$0xff] %v226
    %281 = vst [vmem:[#allocation2 + $0x20] sm:$0xff] %v231
    %282 = vst [vmem:[#allocation2 + $0x28] sm:$0xff] %v234
    %283 = vst [vmem:[#allocation2 + $0x30] sm:$0xff] %v239
    %284 = vst [vmem:[#allocation2 + $0x38] sm:$0xff] %v242
    %285 = vst [vmem:[#allocation2 + $0x40] sm:$0xff] %v247
    %286 = vst [vmem:[#allocation2 + $0x48] sm:$0xff] %v250
    %287 = vst [vmem:[#allocation2 + $0x50] sm:$0xff] %v255
    %288 = vst [vmem:[#allocation2 + $0x58] sm:$0xff] %v258
    %289 = vst [vmem:[#allocation2 + $0x60] sm:$0xff] %v263
    %290 = vst [vmem:[#allocation2 + $0x68] sm:$0xff] %v266
    %291 = vst [vmem:[#allocation2 + $0x70] sm:$0xff] %v271
    %292 = vst [vmem:[#allocation2 + $0x78] sm:$0xff] %v274
    %v293 = vld [vmem:[#allocation2] sm:$0xff]
    %v294 = vld [vmem:[#allocation2 + $0x8] sm:$0xff]
    %v299 = vunpack.c.l.b16 %v82
    %v300 = vunpack.c.l.b16 %v83
    %v301 = vunpack.c.l.b16 %v84
    %v302 = vunpack.c.l.b16 %v85
    %v303 = vpack.c.b16 %v300, %v299
    %v304 = vpack.c.b16 %v302, %v301
    %vm307 = vcmask 261120
    %v309 = vsel %vm307, 0, 0
    %311 = vmatprep.subr.bf16.mxu0 0
    %312 = vmatpush1.bf16.msra.mxu0 %v303
    %313 = vmatprep.subr.bf16.mxu0 0
    %314 = vmatpush1.bf16.msra.mxu0 %v304
    %315 = vmatprep.subr.bf16.mxu0 0
    %316 = vmatpush1.bf16.msra.mxu0 0
    %317 = vmatprep.subr.bf16.mxu0 0
    %318 = vmatpush1.bf16.msra.mxu0 0
    %319 = vmatprep.subr.bf16.mxu0 0
    %320 = vmatpush1.bf16.msra.mxu0 0
    %321 = vmatprep.subr.bf16.mxu0 0
    %322 = vmatpush1.bf16.msra.mxu0 0
    %323 = vmatprep.subr.bf16.mxu0 0
    %324 = vmatpush1.bf16.msra.mxu0 0
    %325 = vmatprep.subr.bf16.mxu0 0
    %326 = vmatpush1.bf16.msra.mxu0 0
    %327 = vmatprep.subr.bf16.mxu0 0
    %328 = vmatpush1.bf16.msra.mxu0 0
    %329 = vmatprep.subr.bf16.mxu0 0
    %330 = vmatpush1.bf16.msra.mxu0 0
    %331 = vmatprep.subr.bf16.mxu0 0
    %332 = vmatpush1.bf16.msra.mxu0 0
    %333 = vmatprep.subr.bf16.mxu0 0
    %334 = vmatpush1.bf16.msra.mxu0 0
    %335 = vmatprep.subr.bf16.mxu0 0
    %336 = vmatpush1.bf16.msra.mxu0 0
    %337 = vmatprep.subr.bf16.mxu0 0
    %338 = vmatpush1.bf16.msra.mxu0 0
    %339 = vmatprep.subr.bf16.mxu0 0
    %340 = vmatpush1.bf16.msra.mxu0 0
    %341 = vmatprep.subr.bf16.mxu0 0
    %342 = vmatpush1.bf16.msra.mxu0 0
    %343 = vmatprep.mubr.bf16.mxu0 0
    %344 = vmatmul.mubr.bf16.gmra.mrb[0].mxu0 %v309
    %v345 = vpop.f32.mrb[0].mxu0
    %v346 = vadd.f32 0.0, %v345
    %v347 = vpop.f32.mrb[0].mxu0
    %v348 = vpop.f32.mrb[0].mxu0
    %v349 = vadd.f32 0.0, %v348
    %v350 = vpop.f32.mrb[0].mxu0
    %351 = vdwg.mxu0
    %v352 = vadd.f32 %v293, %v346
    %v353 = vadd.f32 %v294, %v349
    %v354 = vmul.f32 %v352, %v79
    %v355 = vmul.f32 %v353, %v79
    %v356 = vxor.u32 %v354, 2147483648
    %v357 = vxor.u32 %v355, 2147483648
    %v358 = vmul.f32 %v356, 1.442695
    %v359 = vpow.pop %v358
    %v360 = vmul.f32 %v357, 1.442695
    %v361 = vpow.pop %v360
    %v362 = vadd.f32 %v359, 1.0
    %v363 = vadd.f32 %v361, 1.0
    %v364 = vrcp.pop %v362
    %v365 = vmul.f32 1.0, %v364
    %v366 = vrcp.pop %v363
    %v367 = vmul.f32 1.0, %v366
    %v368 = vmul.f32 %v365, 2.0
    %v369 = vmul.f32 %v367, 2.0
    %v370 = vsub.f32 %v368, 1.0
    %v371 = vsub.f32 %v369, 1.0
    %v372 = vsel %vm78, %v370, %v365
    %v373 = vsel %vm78, %v371, %v367
    %v374 = vmul.f32 %v372, 0.0
    %v375 = vmul.f32 %v373, 0.0
    %378 = vrot.lane.b32.xlu0 %v372, 64
    %v379 = vpop.permute.xlu0 %378
    %380 = vrot.lane.b32.xlu0 %v373, 64
    %v381 = vpop.permute.xlu0 %380
    %v384 = vmul.f32 %v372, %v379
    %v385 = vmul.f32 %v373, %v381
    %388 = vrot.lane.b32.xlu0 %v384, 32
    %v389 = vpop.permute.xlu0 %388
    %390 = vrot.lane.b32.xlu0 %v385, 32
    %v391 = vpop.permute.xlu0 %390
    %v394 = vadd.f32 %v374, %v389
    %v395 = vadd.f32 %v375, %v391
    %v396 = vtanh.pop %v394
    %v397 = vtanh.pop %v395
    %400 = vrot.lane.b32.xlu0 %v396, 64
    %v401 = vpop.permute.xlu0 %400
    %402 = vrot.lane.b32.xlu0 %v397, 64
    %v403 = vpop.permute.xlu0 %402
    %v406 = vmul.f32 %v372, %v401
    %v407 = vmul.f32 %v373, %v403
    %v408 = vpack.c.bf16 %v407, %v406
    %410 = vrot.lane.b32.xlu0 %v408, 32
    %v411 = vpop.permute.xlu0 %410
    %413 = vst.msk [vmem:[#allocation3] sm:$0xff] %vm307, %v411
    %s414 = scalar_lea.vmem [#allocation2], 16
    %v415 = vld [vmem:[%s414] sm:$0xff]
    %v416 = vld [vmem:[%s414 + $0x8] sm:$0xff]
    %v418 = vsel %vm307, %v411, 0
    %420 = vmatprep.subr.bf16.mxu0 0
    %421 = vmatpush1.bf16.msra.mxu0 %v303
    %422 = vmatprep.subr.bf16.mxu0 0
    %423 = vmatpush1.bf16.msra.mxu0 %v304
    %424 = vmatprep.subr.bf16.mxu0 0
    %425 = vmatpush1.bf16.msra.mxu0 0
    %426 = vmatprep.subr.bf16.mxu0 0
    %427 = vmatpush1.bf16.msra.mxu0 0
    %428 = vmatprep.subr.bf16.mxu0 0
    %429 = vmatpush1.bf16.msra.mxu0 0
    %430 = vmatprep.subr.bf16.mxu0 0
    %431 = vmatpush1.bf16.msra.mxu0 0
    %432 = vmatprep.subr.bf16.mxu0 0
    %433 = vmatpush1.bf16.msra.mxu0 0
    %434 = vmatprep.subr.bf16.mxu0 0
    %435 = vmatpush1.bf16.msra.mxu0 0
    %436 = vmatprep.subr.bf16.mxu0 0
    %437 = vmatpush1.bf16.msra.mxu0 0
    %438 = vmatprep.subr.bf16.mxu0 0
    %439 = vmatpush1.bf16.msra.mxu0 0
    %440 = vmatprep.subr.bf16.mxu0 0
    %441 = vmatpush1.bf16.msra.mxu0 0
    %442 = vmatprep.subr.bf16.mxu0 0
    %443 = vmatpush1.bf16.msra.mxu0 0
    %444 = vmatprep.subr.bf16.mxu0 0
    %445 = vmatpush1.bf16.msra.mxu0 0
    %446 = vmatprep.subr.bf16.mxu0 0
    %447 = vmatpush1.bf16.msra.mxu0 0
    %448 = vmatprep.subr.bf16.mxu0 0
    %449 = vmatpush1.bf16.msra.mxu0 0
    %450 = vmatprep.subr.bf16.mxu0 0
    %451 = vmatpush1.bf16.msra.mxu0 0
    %452 = vmatprep.mubr.bf16.mxu0 0
    %453 = vmatmul.mubr.bf16.gmra.mrb[0].mxu0 %v418
    %v454 = vpop.f32.mrb[0].mxu0
    %v455 = vadd.f32 0.0, %v454
    %v456 = vpop.f32.mrb[0].mxu0
    %v457 = vpop.f32.mrb[0].mxu0
    %v458 = vadd.f32 0.0, %v457
    %v459 = vpop.f32.mrb[0].mxu0
    %460 = vdwg.mxu0
    %v461 = vadd.f32 %v415, %v455
    %v462 = vadd.f32 %v416, %v458
    %v463 = vmul.f32 %v461, %v79
    %v464 = vmul.f32 %v462, %v79
    %v465 = vxor.u32 %v463, 2147483648
    %v466 = vxor.u32 %v464, 2147483648
    %v467 = vmul.f32 %v465, 1.442695
    %v468 = vpow.pop %v467
    %v469 = vmul.f32 %v466, 1.442695
    %v470 = vpow.pop %v469
    %v471 = vadd.f32 %v468, 1.0
    %v472 = vadd.f32 %v470, 1.0
    %v473 = vrcp.pop %v471
    %v474 = vmul.f32 1.0, %v473
    %v475 = vrcp.pop %v472
    %v476 = vmul.f32 1.0, %v475
    %v477 = vmul.f32 %v474, 2.0
    %v478 = vmul.f32 %v476, 2.0
    %v479 = vsub.f32 %v477, 1.0
    %v480 = vsub.f32 %v478, 1.0
    %v481 = vsel %vm78, %v479, %v474
    %v482 = vsel %vm78, %v480, %v476
    %v483 = vmul.f32 %v481, %v394
    %v484 = vmul.f32 %v482, %v395
    %487 = vrot.lane.b32.xlu0 %v481, 64
    %v488 = vpop.permute.xlu0 %487
    %489 = vrot.lane.b32.xlu0 %v482, 64
    %v490 = vpop.permute.xlu0 %489
    %v493 = vmul.f32 %v481, %v488
    %v494 = vmul.f32 %v482, %v490
    %497 = vrot.lane.b32.xlu0 %v493, 32
    %v498 = vpop.permute.xlu0 %497
    %499 = vrot.lane.b32.xlu0 %v494, 32
    %v500 = vpop.permute.xlu0 %499
    %v503 = vadd.f32 %v483, %v498
    %v504 = vadd.f32 %v484, %v500
    %v505 = vtanh.pop %v503
    %v506 = vtanh.pop %v504
    %509 = vrot.lane.b32.xlu0 %v505, 64
    %v510 = vpop.permute.xlu0 %509
    %511 = vrot.lane.b32.xlu0 %v506, 64
    %v512 = vpop.permute.xlu0 %511
    %v515 = vmul.f32 %v481, %v510
    %v516 = vmul.f32 %v482, %v512
    %v517 = vpack.c.bf16 %v516, %v515
    %519 = vrot.lane.b32.xlu0 %v517, 32
    %v520 = vpop.permute.xlu0 %519
    %s522 = scalar_lea.vmem [#allocation3], 8
    %523 = vst.msk [vmem:[%s522] sm:$0xff] %vm307, %v520
    %s524 = scalar_lea.vmem [#allocation2], 32
    %v525 = vld [vmem:[%s524] sm:$0xff]
    %v526 = vld [vmem:[%s524 + $0x8] sm:$0xff]
    %v528 = vsel %vm307, %v520, 0
    %530 = vmatprep.subr.bf16.mxu0 0
    %531 = vmatpush1.bf16.msra.mxu0 %v303
    %532 = vmatprep.subr.bf16.mxu0 0
    %533 = vmatpush1.bf16.msra.mxu0 %v304
    %534 = vmatprep.subr.bf16.mxu0 0
    %535 = vmatpush1.bf16.msra.mxu0 0
    %536 = vmatprep.subr.bf16.mxu0 0
    %537 = vmatpush1.bf16.msra.mxu0 0
    %538 = vmatprep.subr.bf16.mxu0 0
    %539 = vmatpush1.bf16.msra.mxu0 0
    %540 = vmatprep.subr.bf16.mxu0 0
    %541 = vmatpush1.bf16.msra.mxu0 0
    %542 = vmatprep.subr.bf16.mxu0 0
    %543 = vmatpush1.bf16.msra.mxu0 0
    %544 = vmatprep.subr.bf16.mxu0 0
    %545 = vmatpush1.bf16.msra.mxu0 0
    %546 = vmatprep.subr.bf16.mxu0 0
    %547 = vmatpush1.bf16.msra.mxu0 0
    %548 = vmatprep.subr.bf16.mxu0 0
    %549 = vmatpush1.bf16.msra.mxu0 0
    %550 = vmatprep.subr.bf16.mxu0 0
    %551 = vmatpush1.bf16.msra.mxu0 0
    %552 = vmatprep.subr.bf16.mxu0 0
    %553 = vmatpush1.bf16.msra.mxu0 0
    %554 = vmatprep.subr.bf16.mxu0 0
    %555 = vmatpush1.bf16.msra.mxu0 0
    %556 = vmatprep.subr.bf16.mxu0 0
    %557 = vmatpush1.bf16.msra.mxu0 0
    %558 = vmatprep.subr.bf16.mxu0 0
    %559 = vmatpush1.bf16.msra.mxu0 0
    %560 = vmatprep.subr.bf16.mxu0 0
    %561 = vmatpush1.bf16.msra.mxu0 0
    %562 = vmatprep.mubr.bf16.mxu0 0
    %563 = vmatmul.mubr.bf16.gmra.mrb[0].mxu0 %v528
    %v564 = vpop.f32.mrb[0].mxu0
    %v565 = vadd.f32 0.0, %v564
    %v566 = vpop.f32.mrb[0].mxu0
    %v567 = vpop.f32.mrb[0].mxu0
    %v568 = vadd.f32 0.0, %v567
    %v569 = vpop.f32.mrb[0].mxu0
    %570 = vdwg.mxu0
    %v571 = vadd.f32 %v525, %v565
    %v572 = vadd.f32 %v526, %v568
    %v573 = vmul.f32 %v571, %v79
    %v574 = vmul.f32 %v572, %v79
    %v575 = vxor.u32 %v573, 2147483648
    %v576 = vxor.u32 %v574, 2147483648
    %v577 = vmul.f32 %v575, 1.442695
    %v578 = vpow.pop %v577
    %v579 = vmul.f32 %v576, 1.442695
    %v580 = vpow.pop %v579
    %v581 = vadd.f32 %v578, 1.0
    %v582 = vadd.f32 %v580, 1.0
    %v583 = vrcp.pop %v581
    %v584 = vmul.f32 1.0, %v583
    %v585 = vrcp.pop %v582
    %v586 = vmul.f32 1.0, %v585
    %v587 = vmul.f32 %v584, 2.0
    %v588 = vmul.f32 %v586, 2.0
    %v589 = vsub.f32 %v587, 1.0
    %v590 = vsub.f32 %v588, 1.0
    %v591 = vsel %vm78, %v589, %v584
    %v592 = vsel %vm78, %v590, %v586
    %v593 = vmul.f32 %v591, %v503
    %v594 = vmul.f32 %v592, %v504
    %597 = vrot.lane.b32.xlu0 %v591, 64
    %v598 = vpop.permute.xlu0 %597
    %599 = vrot.lane.b32.xlu0 %v592, 64
    %v600 = vpop.permute.xlu0 %599
    %v603 = vmul.f32 %v591, %v598
    %v604 = vmul.f32 %v592, %v600
    %607 = vrot.lane.b32.xlu0 %v603, 32
    %v608 = vpop.permute.xlu0 %607
    %609 = vrot.lane.b32.xlu0 %v604, 32
    %v610 = vpop.permute.xlu0 %609
    %v613 = vadd.f32 %v593, %v608
    %v614 = vadd.f32 %v594, %v610
    %v615 = vtanh.pop %v613
    %v616 = vtanh.pop %v614
    %619 = vrot.lane.b32.xlu0 %v615, 64
    %v620 = vpop.permute.xlu0 %619
    %621 = vrot.lane.b32.xlu0 %v616, 64
    %v622 = vpop.permute.xlu0 %621
    %v625 = vmul.f32 %v591, %v620
    %v626 = vmul.f32 %v592, %v622
    %v627 = vpack.c.bf16 %v626, %v625
    %629 = vrot.lane.b32.xlu0 %v627, 32
    %v630 = vpop.permute.xlu0 %629
    %s632 = scalar_lea.vmem [#allocation3], 16
    %633 = vst.msk [vmem:[%s632] sm:$0xff] %vm307, %v630
    %s634 = scalar_lea.vmem [#allocation2], 48
    %v635 = vld [vmem:[%s634] sm:$0xff]
    %v636 = vld [vmem:[%s634 + $0x8] sm:$0xff]
    %v638 = vsel %vm307, %v630, 0
    %640 = vmatprep.subr.bf16.mxu0 0
    %641 = vmatpush1.bf16.msra.mxu0 %v303
    %642 = vmatprep.subr.bf16.mxu0 0
    %643 = vmatpush1.bf16.msra.mxu0 %v304
    %644 = vmatprep.subr.bf16.mxu0 0
    %645 = vmatpush1.bf16.msra.mxu0 0
    %646 = vmatprep.subr.bf16.mxu0 0
    %647 = vmatpush1.bf16.msra.mxu0 0
    %648 = vmatprep.subr.bf16.mxu0 0
    %649 = vmatpush1.bf16.msra.mxu0 0
    %650 = vmatprep.subr.bf16.mxu0 0
    %651 = vmatpush1.bf16.msra.mxu0 0
    %652 = vmatprep.subr.bf16.mxu0 0
    %653 = vmatpush1.bf16.msra.mxu0 0
    %654 = vmatprep.subr.bf16.mxu0 0
    %655 = vmatpush1.bf16.msra.mxu0 0
    %656 = vmatprep.subr.bf16.mxu0 0
    %657 = vmatpush1.bf16.msra.mxu0 0
    %658 = vmatprep.subr.bf16.mxu0 0
    %659 = vmatpush1.bf16.msra.mxu0 0
    %660 = vmatprep.subr.bf16.mxu0 0
    %661 = vmatpush1.bf16.msra.mxu0 0
    %662 = vmatprep.subr.bf16.mxu0 0
    %663 = vmatpush1.bf16.msra.mxu0 0
    %664 = vmatprep.subr.bf16.mxu0 0
    %665 = vmatpush1.bf16.msra.mxu0 0
    %666 = vmatprep.subr.bf16.mxu0 0
    %667 = vmatpush1.bf16.msra.mxu0 0
    %668 = vmatprep.subr.bf16.mxu0 0
    %669 = vmatpush1.bf16.msra.mxu0 0
    %670 = vmatprep.subr.bf16.mxu0 0
    %671 = vmatpush1.bf16.msra.mxu0 0
    %672 = vmatprep.mubr.bf16.mxu0 0
    %673 = vmatmul.mubr.bf16.gmra.mrb[0].mxu0 %v638
    %v674 = vpop.f32.mrb[0].mxu0
    %v675 = vadd.f32 0.0, %v674
    %v676 = vpop.f32.mrb[0].mxu0
    %v677 = vpop.f32.mrb[0].mxu0
    %v678 = vadd.f32 0.0, %v677
    %v679 = vpop.f32.mrb[0].mxu0
    %680 = vdwg.mxu0
    %v681 = vadd.f32 %v635, %v675
    %v682 = vadd.f32 %v636, %v678
    %v683 = vmul.f32 %v681, %v79
    %v684 = vmul.f32 %v682, %v79
    %v685 = vxor.u32 %v683, 2147483648
    %v686 = vxor.u32 %v684, 2147483648
    %v687 = vmul.f32 %v685, 1.442695
    %v688 = vpow.pop %v687
    %v689 = vmul.f32 %v686, 1.442695
    %v690 = vpow.pop %v689
    %v691 = vadd.f32 %v688, 1.0
    %v692 = vadd.f32 %v690, 1.0
    %v693 = vrcp.pop %v691
    %v694 = vmul.f32 1.0, %v693
    %v695 = vrcp.pop %v692
    %v696 = vmul.f32 1.0, %v695
    %v697 = vmul.f32 %v694, 2.0
    %v698 = vmul.f32 %v696, 2.0
    %v699 = vsub.f32 %v697, 1.0
    %v700 = vsub.f32 %v698, 1.0
    %v701 = vsel %vm78, %v699, %v694
    %v702 = vsel %vm78, %v700, %v696
    %v703 = vmul.f32 %v701, %v613
    %v704 = vmul.f32 %v702, %v614
    %707 = vrot.lane.b32.xlu0 %v701, 64
    %v708 = vpop.permute.xlu0 %707
    %709 = vrot.lane.b32.xlu0 %v702, 64
    %v710 = vpop.permute.xlu0 %709
    %v713 = vmul.f32 %v701, %v708
    %v714 = vmul.f32 %v702, %v710
    %717 = vrot.lane.b32.xlu0 %v713, 32
    %v718 = vpop.permute.xlu0 %717
    %719 = vrot.lane.b32.xlu0 %v714, 32
    %v720 = vpop.permute.xlu0 %719
    %v723 = vadd.f32 %v703, %v718
    %v724 = vadd.f32 %v704, %v720
    %v725 = vtanh.pop %v723
    %v726 = vtanh.pop %v724
    %729 = vrot.lane.b32.xlu0 %v725, 64
    %v730 = vpop.permute.xlu0 %729
    %731 = vrot.lane.b32.xlu0 %v726, 64
    %v732 = vpop.permute.xlu0 %731
    %v735 = vmul.f32 %v701, %v730
    %v736 = vmul.f32 %v702, %v732
    %v737 = vpack.c.bf16 %v736, %v735
    %739 = vrot.lane.b32.xlu0 %v737, 32
    %v740 = vpop.permute.xlu0 %739
    %s742 = scalar_lea.vmem [#allocation3], 24
    %743 = vst.msk [vmem:[%s742] sm:$0xff] %vm307, %v740
    %s744 = scalar_lea.vmem [#allocation2], 64
    %v745 = vld [vmem:[%s744] sm:$0xff]
    %v746 = vld [vmem:[%s744 + $0x8] sm:$0xff]
    %v748 = vsel %vm307, %v740, 0
    %750 = vmatprep.subr.bf16.mxu0 0
    %751 = vmatpush1.bf16.msra.mxu0 %v303
    %752 = vmatprep.subr.bf16.mxu0 0
    %753 = vmatpush1.bf16.msra.mxu0 %v304
    %754 = vmatprep.subr.bf16.mxu0 0
    %755 = vmatpush1.bf16.msra.mxu0 0
    %756 = vmatprep.subr.bf16.mxu0 0
    %757 = vmatpush1.bf16.msra.mxu0 0
    %758 = vmatprep.subr.bf16.mxu0 0
    %759 = vmatpush1.bf16.msra.mxu0 0
    %760 = vmatprep.subr.bf16.mxu0 0
    %761 = vmatpush1.bf16.msra.mxu0 0
    %762 = vmatprep.subr.bf16.mxu0 0
    %763 = vmatpush1.bf16.msra.mxu0 0
    %764 = vmatprep.subr.bf16.mxu0 0
    %765 = vmatpush1.bf16.msra.mxu0 0
    %766 = vmatprep.subr.bf16.mxu0 0
    %767 = vmatpush1.bf16.msra.mxu0 0
    %768 = vmatprep.subr.bf16.mxu0 0
    %769 = vmatpush1.bf16.msra.mxu0 0
    %770 = vmatprep.subr.bf16.mxu0 0
    %771 = vmatpush1.bf16.msra.mxu0 0
    %772 = vmatprep.subr.bf16.mxu0 0
    %773 = vmatpush1.bf16.msra.mxu0 0
    %774 = vmatprep.subr.bf16.mxu0 0
    %775 = vmatpush1.bf16.msra.mxu0 0
    %776 = vmatprep.subr.bf16.mxu0 0
    %777 = vmatpush1.bf16.msra.mxu0 0
    %778 = vmatprep.subr.bf16.mxu0 0
    %779 = vmatpush1.bf16.msra.mxu0 0
    %780 = vmatprep.subr.bf16.mxu0 0
    %781 = vmatpush1.bf16.msra.mxu0 0
    %782 = vmatprep.mubr.bf16.mxu0 0
    %783 = vmatmul.mubr.bf16.gmra.mrb[0].mxu0 %v748
    %v784 = vpop.f32.mrb[0].mxu0
    %v785 = vadd.f32 0.0, %v784
    %v786 = vpop.f32.mrb[0].mxu0
    %v787 = vpop.f32.mrb[0].mxu0
    %v788 = vadd.f32 0.0, %v787
    %v789 = vpop.f32.mrb[0].mxu0
    %790 = vdwg.mxu0
    %v791 = vadd.f32 %v745, %v785
    %v792 = vadd.f32 %v746, %v788
    %v793 = vmul.f32 %v791, %v79
    %v794 = vmul.f32 %v792, %v79
    %v795 = vxor.u32 %v793, 2147483648
    %v796 = vxor.u32 %v794, 2147483648
    %v797 = vmul.f32 %v795, 1.442695
    %v798 = vpow.pop %v797
    %v799 = vmul.f32 %v796, 1.442695
    %v800 = vpow.pop %v799
    %v801 = vadd.f32 %v798, 1.0
    %v802 = vadd.f32 %v800, 1.0
    %v803 = vrcp.pop %v801
    %v804 = vmul.f32 1.0, %v803
    %v805 = vrcp.pop %v802
    %v806 = vmul.f32 1.0, %v805
    %v807 = vmul.f32 %v804, 2.0
    %v808 = vmul.f32 %v806, 2.0
    %v809 = vsub.f32 %v807, 1.0
    %v810 = vsub.f32 %v808, 1.0
    %v811 = vsel %vm78, %v809, %v804
    %v812 = vsel %vm78, %v810, %v806
    %v813 = vmul.f32 %v811, %v723
    %v814 = vmul.f32 %v812, %v724
    %817 = vrot.lane.b32.xlu0 %v811, 64
    %v818 = vpop.permute.xlu0 %817
    %819 = vrot.lane.b32.xlu0 %v812, 64
    %v820 = vpop.permute.xlu0 %819
    %v823 = vmul.f32 %v811, %v818
    %v824 = vmul.f32 %v812, %v820
    %827 = vrot.lane.b32.xlu0 %v823, 32
    %v828 = vpop.permute.xlu0 %827
    %829 = vrot.lane.b32.xlu0 %v824, 32
    %v830 = vpop.permute.xlu0 %829
    %v833 = vadd.f32 %v813, %v828
    %v834 = vadd.f32 %v814, %v830
    %v835 = vtanh.pop %v833
    %v836 = vtanh.pop %v834
    %839 = vrot.lane.b32.xlu0 %v835, 64
    %v840 = vpop.permute.xlu0 %839
    %841 = vrot.lane.b32.xlu0 %v836, 64
    %v842 = vpop.permute.xlu0 %841
    %v845 = vmul.f32 %v811, %v840
    %v846 = vmul.f32 %v812, %v842
    %v847 = vpack.c.bf16 %v846, %v845
    %849 = vrot.lane.b32.xlu0 %v847, 32
    %v850 = vpop.permute.xlu0 %849
    %s852 = scalar_lea.vmem [#allocation3], 32
    %853 = vst.msk [vmem:[%s852] sm:$0xff] %vm307, %v850
    %s854 = scalar_lea.vmem [#allocation2], 80
    %v855 = vld [vmem:[%s854] sm:$0xff]
    %v856 = vld [vmem:[%s854 + $0x8] sm:$0xff]
    %v858 = vsel %vm307, %v850, 0
    %860 = vmatprep.subr.bf16.mxu0 0
    %861 = vmatpush1.bf16.msra.mxu0 %v303
    %862 = vmatprep.subr.bf16.mxu0 0
    %863 = vmatpush1.bf16.msra.mxu0 %v304
    %864 = vmatprep.subr.bf16.mxu0 0
    %865 = vmatpush1.bf16.msra.mxu0 0
    %866 = vmatprep.subr.bf16.mxu0 0
    %867 = vmatpush1.bf16.msra.mxu0 0
    %868 = vmatprep.subr.bf16.mxu0 0
    %869 = vmatpush1.bf16.msra.mxu0 0
    %870 = vmatprep.subr.bf16.mxu0 0
    %871 = vmatpush1.bf16.msra.mxu0 0
    %872 = vmatprep.subr.bf16.mxu0 0
    %873 = vmatpush1.bf16.msra.mxu0 0
    %874 = vmatprep.subr.bf16.mxu0 0
    %875 = vmatpush1.bf16.msra.mxu0 0
    %876 = vmatprep.subr.bf16.mxu0 0
    %877 = vmatpush1.bf16.msra.mxu0 0
    %878 = vmatprep.subr.bf16.mxu0 0
    %879 = vmatpush1.bf16.msra.mxu0 0
    %880 = vmatprep.subr.bf16.mxu0 0
    %881 = vmatpush1.bf16.msra.mxu0 0
    %882 = vmatprep.subr.bf16.mxu0 0
    %883 = vmatpush1.bf16.msra.mxu0 0
    %884 = vmatprep.subr.bf16.mxu0 0
    %885 = vmatpush1.bf16.msra.mxu0 0
    %886 = vmatprep.subr.bf16.mxu0 0
    %887 = vmatpush1.bf16.msra.mxu0 0
    %888 = vmatprep.subr.bf16.mxu0 0
    %889 = vmatpush1.bf16.msra.mxu0 0
    %890 = vmatprep.subr.bf16.mxu0 0
    %891 = vmatpush1.bf16.msra.mxu0 0
    %892 = vmatprep.mubr.bf16.mxu0 0
    %893 = vmatmul.mubr.bf16.gmra.mrb[0].mxu0 %v858
    %v894 = vpop.f32.mrb[0].mxu0
    %v895 = vadd.f32 0.0, %v894
    %v896 = vpop.f32.mrb[0].mxu0
    %v897 = vpop.f32.mrb[0].mxu0
    %v898 = vadd.f32 0.0, %v897
    %v899 = vpop.f32.mrb[0].mxu0
    %900 = vdwg.mxu0
    %v901 = vadd.f32 %v855, %v895
    %v902 = vadd.f32 %v856, %v898
    %v903 = vmul.f32 %v901, %v79
    %v904 = vmul.f32 %v902, %v79
    %v905 = vxor.u32 %v903, 2147483648
    %v906 = vxor.u32 %v904, 2147483648
    %v907 = vmul.f32 %v905, 1.442695
    %v908 = vpow.pop %v907
    %v909 = vmul.f32 %v906, 1.442695
    %v910 = vpow.pop %v909
    %v911 = vadd.f32 %v908, 1.0
    %v912 = vadd.f32 %v910, 1.0
    %v913 = vrcp.pop %v911
    %v914 = vmul.f32 1.0, %v913
    %v915 = vrcp.pop %v912
    %v916 = vmul.f32 1.0, %v915
    %v917 = vmul.f32 %v914, 2.0
    %v918 = vmul.f32 %v916, 2.0
    %v919 = vsub.f32 %v917, 1.0
    %v920 = vsub.f32 %v918, 1.0
    %v921 = vsel %vm78, %v919, %v914
    %v922 = vsel %vm78, %v920, %v916
    %v923 = vmul.f32 %v921, %v833
    %v924 = vmul.f32 %v922, %v834
    %927 = vrot.lane.b32.xlu0 %v921, 64
    %v928 = vpop.permute.xlu0 %927
    %929 = vrot.lane.b32.xlu0 %v922, 64
    %v930 = vpop.permute.xlu0 %929
    %v933 = vmul.f32 %v921, %v928
    %v934 = vmul.f32 %v922, %v930
    %937 = vrot.lane.b32.xlu0 %v933, 32
    %v938 = vpop.permute.xlu0 %937
    %939 = vrot.lane.b32.xlu0 %v934, 32
    %v940 = vpop.permute.xlu0 %939
    %v943 = vadd.f32 %v923, %v938
    %v944 = vadd.f32 %v924, %v940
    %v945 = vtanh.pop %v943
    %v946 = vtanh.pop %v944
    %949 = vrot.lane.b32.xlu0 %v945, 64
    %v950 = vpop.permute.xlu0 %949
    %951 = vrot.lane.b32.xlu0 %v946, 64
    %v952 = vpop.permute.xlu0 %951
    %v955 = vmul.f32 %v921, %v950
    %v956 = vmul.f32 %v922, %v952
    %v957 = vpack.c.bf16 %v956, %v955
    %959 = vrot.lane.b32.xlu0 %v957, 32
    %v960 = vpop.permute.xlu0 %959
    %s962 = scalar_lea.vmem [#allocation3], 40
    %963 = vst.msk [vmem:[%s962] sm:$0xff] %vm307, %v960
    %s964 = scalar_lea.vmem [#allocation2], 96
    %v965 = vld [vmem:[%s964] sm:$0xff]
    %v966 = vld [vmem:[%s964 + $0x8] sm:$0xff]
    %v968 = vsel %vm307, %v960, 0
    %970 = vmatprep.subr.bf16.mxu0 0
    %971 = vmatpush1.bf16.msra.mxu0 %v303
    %972 = vmatprep.subr.bf16.mxu0 0
    %973 = vmatpush1.bf16.msra.mxu0 %v304
    %974 = vmatprep.subr.bf16.mxu0 0
    %975 = vmatpush1.bf16.msra.mxu0 0
    %976 = vmatprep.subr.bf16.mxu0 0
    %977 = vmatpush1.bf16.msra.mxu0 0
    %978 = vmatprep.subr.bf16.mxu0 0
    %979 = vmatpush1.bf16.msra.mxu0 0
    %980 = vmatprep.subr.bf16.mxu0 0
    %981 = vmatpush1.bf16.msra.mxu0 0
    %982 = vmatprep.subr.bf16.mxu0 0
    %983 = vmatpush1.bf16.msra.mxu0 0
    %984 = vmatprep.subr.bf16.mxu0 0
    %985 = vmatpush1.bf16.msra.mxu0 0
    %986 = vmatprep.subr.bf16.mxu0 0
    %987 = vmatpush1.bf16.msra.mxu0 0
    %988 = vmatprep.subr.bf16.mxu0 0
    %989 = vmatpush1.bf16.msra.mxu0 0
    %990 = vmatprep.subr.bf16.mxu0 0
    %991 = vmatpush1.bf16.msra.mxu0 0
    %992 = vmatprep.subr.bf16.mxu0 0
    %993 = vmatpush1.bf16.msra.mxu0 0
    %994 = vmatprep.subr.bf16.mxu0 0
    %995 = vmatpush1.bf16.msra.mxu0 0
    %996 = vmatprep.subr.bf16.mxu0 0
    %997 = vmatpush1.bf16.msra.mxu0 0
    %998 = vmatprep.subr.bf16.mxu0 0
    %999 = vmatpush1.bf16.msra.mxu0 0
    %1000 = vmatprep.subr.bf16.mxu0 0
    %1001 = vmatpush1.bf16.msra.mxu0 0
    %1002 = vmatprep.mubr.bf16.mxu0 0
    %1003 = vmatmul.mubr.bf16.gmra.mrb[0].mxu0 %v968
    %v1004 = vpop.f32.mrb[0].mxu0
    %v1005 = vadd.f32 0.0, %v1004
    %v1006 = vpop.f32.mrb[0].mxu0
    %v1007 = vpop.f32.mrb[0].mxu0
    %v1008 = vadd.f32 0.0, %v1007
    %v1009 = vpop.f32.mrb[0].mxu0
    %1010 = vdwg.mxu0
    %v1011 = vadd.f32 %v965, %v1005
    %v1012 = vadd.f32 %v966, %v1008
    %v1013 = vmul.f32 %v1011, %v79
    %v1014 = vmul.f32 %v1012, %v79
    %v1015 = vxor.u32 %v1013, 2147483648
    %v1016 = vxor.u32 %v1014, 2147483648
    %v1017 = vmul.f32 %v1015, 1.442695
    %v1018 = vpow.pop %v1017
    %v1019 = vmul.f32 %v1016, 1.442695
    %v1020 = vpow.pop %v1019
    %v1021 = vadd.f32 %v1018, 1.0
    %v1022 = vadd.f32 %v1020, 1.0
    %v1023 = vrcp.pop %v1021
    %v1024 = vmul.f32 1.0, %v1023
    %v1025 = vrcp.pop %v1022
    %v1026 = vmul.f32 1.0, %v1025
    %v1027 = vmul.f32 %v1024, 2.0
    %v1028 = vmul.f32 %v1026, 2.0
    %v1029 = vsub.f32 %v1027, 1.0
    %v1030 = vsub.f32 %v1028, 1.0
    %v1031 = vsel %vm78, %v1029, %v1024
    %v1032 = vsel %vm78, %v1030, %v1026
    %v1033 = vmul.f32 %v1031, %v943
    %v1034 = vmul.f32 %v1032, %v944
    %1037 = vrot.lane.b32.xlu0 %v1031, 64
    %v1038 = vpop.permute.xlu0 %1037
    %1039 = vrot.lane.b32.xlu0 %v1032, 64
    %v1040 = vpop.permute.xlu0 %1039
    %v1043 = vmul.f32 %v1031, %v1038
    %v1044 = vmul.f32 %v1032, %v1040
    %1047 = vrot.lane.b32.xlu0 %v1043, 32
    %v1048 = vpop.permute.xlu0 %1047
    %1049 = vrot.lane.b32.xlu0 %v1044, 32
    %v1050 = vpop.permute.xlu0 %1049
    %v1053 = vadd.f32 %v1033, %v1048
    %v1054 = vadd.f32 %v1034, %v1050
    %v1055 = vtanh.pop %v1053
    %v1056 = vtanh.pop %v1054
    %1059 = vrot.lane.b32.xlu0 %v1055, 64
    %v1060 = vpop.permute.xlu0 %1059
    %1061 = vrot.lane.b32.xlu0 %v1056, 64
    %v1062 = vpop.permute.xlu0 %1061
    %v1065 = vmul.f32 %v1031, %v1060
    %v1066 = vmul.f32 %v1032, %v1062
    %v1067 = vpack.c.bf16 %v1066, %v1065
    %1069 = vrot.lane.b32.xlu0 %v1067, 32
    %v1070 = vpop.permute.xlu0 %1069
    %s1072 = scalar_lea.vmem [#allocation3], 48
    %1073 = vst.msk [vmem:[%s1072] sm:$0xff] %vm307, %v1070
    %s1074 = scalar_lea.vmem [#allocation2], 112
    %v1075 = vld [vmem:[%s1074] sm:$0xff]
    %v1076 = vld [vmem:[%s1074 + $0x8] sm:$0xff]
    %v1078 = vsel %vm307, %v1070, 0
    %1080 = vmatprep.subr.bf16.mxu0 0
    %1081 = vmatpush1.bf16.msra.mxu0 %v303
    %1082 = vmatprep.subr.bf16.mxu0 0
    %1083 = vmatpush1.bf16.msra.mxu0 %v304
    %1084 = vmatprep.subr.bf16.mxu0 0
    %1085 = vmatpush1.bf16.msra.mxu0 0
    %1086 = vmatprep.subr.bf16.mxu0 0
    %1087 = vmatpush1.bf16.msra.mxu0 0
    %1088 = vmatprep.subr.bf16.mxu0 0
    %1089 = vmatpush1.bf16.msra.mxu0 0
    %1090 = vmatprep.subr.bf16.mxu0 0
    %1091 = vmatpush1.bf16.msra.mxu0 0
    %1092 = vmatprep.subr.bf16.mxu0 0
    %1093 = vmatpush1.bf16.msra.mxu0 0
    %1094 = vmatprep.subr.bf16.mxu0 0
    %1095 = vmatpush1.bf16.msra.mxu0 0
    %1096 = vmatprep.subr.bf16.mxu0 0
    %1097 = vmatpush1.bf16.msra.mxu0 0
    %1098 = vmatprep.subr.bf16.mxu0 0
    %1099 = vmatpush1.bf16.msra.mxu0 0
    %1100 = vmatprep.subr.bf16.mxu0 0
    %1101 = vmatpush1.bf16.msra.mxu0 0
    %1102 = vmatprep.subr.bf16.mxu0 0
    %1103 = vmatpush1.bf16.msra.mxu0 0
    %1104 = vmatprep.subr.bf16.mxu0 0
    %1105 = vmatpush1.bf16.msra.mxu0 0
    %1106 = vmatprep.subr.bf16.mxu0 0
    %1107 = vmatpush1.bf16.msra.mxu0 0
    %1108 = vmatprep.subr.bf16.mxu0 0
    %1109 = vmatpush1.bf16.msra.mxu0 0
    %1110 = vmatprep.subr.bf16.mxu0 0
    %1111 = vmatpush1.bf16.msra.mxu0 0
    %1112 = vmatprep.mubr.bf16.mxu0 0
    %1113 = vmatmul.mubr.bf16.gmra.mrb[0].mxu0 %v1078
    %v1114 = vpop.f32.mrb[0].mxu0
    %v1115 = vadd.f32 0.0, %v1114
    %v1116 = vpop.f32.mrb[0].mxu0
    %v1117 = vpop.f32.mrb[0].mxu0
    %v1118 = vadd.f32 0.0, %v1117
    %v1119 = vpop.f32.mrb[0].mxu0
    %1120 = vdwg.mxu0
    %v1121 = vadd.f32 %v1075, %v1115
    %v1122 = vadd.f32 %v1076, %v1118
    %v1123 = vmul.f32 %v1121, %v79
    %v1124 = vmul.f32 %v1122, %v79
    %v1125 = vxor.u32 %v1123, 2147483648
    %v1126 = vxor.u32 %v1124, 2147483648
    %v1127 = vmul.f32 %v1125, 1.442695
    %v1128 = vpow.pop %v1127
    %v1129 = vmul.f32 %v1126, 1.442695
    %v1130 = vpow.pop %v1129
    %v1131 = vadd.f32 %v1128, 1.0
    %v1132 = vadd.f32 %v1130, 1.0
    %v1133 = vrcp.pop %v1131
    %v1134 = vmul.f32 1.0, %v1133
    %v1135 = vrcp.pop %v1132
    %v1136 = vmul.f32 1.0, %v1135
    %v1137 = vmul.f32 %v1134, 2.0
    %v1138 = vmul.f32 %v1136, 2.0
    %v1139 = vsub.f32 %v1137, 1.0
    %v1140 = vsub.f32 %v1138, 1.0
    %v1141 = vsel %vm78, %v1139, %v1134
    %v1142 = vsel %vm78, %v1140, %v1136
    %v1143 = vmul.f32 %v1141, %v1053
    %v1144 = vmul.f32 %v1142, %v1054
    %1147 = vrot.lane.b32.xlu0 %v1141, 64
    %v1148 = vpop.permute.xlu0 %1147
    %1149 = vrot.lane.b32.xlu0 %v1142, 64
    %v1150 = vpop.permute.xlu0 %1149
    %v1153 = vmul.f32 %v1141, %v1148
    %v1154 = vmul.f32 %v1142, %v1150
    %1157 = vrot.lane.b32.xlu0 %v1153, 32
    %v1158 = vpop.permute.xlu0 %1157
    %1159 = vrot.lane.b32.xlu0 %v1154, 32
    %v1160 = vpop.permute.xlu0 %1159
    %v1163 = vadd.f32 %v1143, %v1158
    %v1164 = vadd.f32 %v1144, %v1160
    %v1165 = vtanh.pop %v1163
    %v1166 = vtanh.pop %v1164
    %1169 = vrot.lane.b32.xlu0 %v1165, 64
    %v1170 = vpop.permute.xlu0 %1169
    %1171 = vrot.lane.b32.xlu0 %v1166, 64
    %v1172 = vpop.permute.xlu0 %1171
    %v1175 = vmul.f32 %v1141, %v1170
    %v1176 = vmul.f32 %v1142, %v1172
    %v1177 = vpack.c.bf16 %v1176, %v1175
    %1179 = vrot.lane.b32.xlu0 %v1177, 32
    %v1180 = vpop.permute.xlu0 %1179
    %s1182 = scalar_lea.vmem [#allocation3], 56
    %1183 = vst.msk [vmem:[%s1182] sm:$0xff] %vm307, %v1180
    %v1184 = vld [vmem:[%s4] sm:$0xf]
    %v1185 = vld [vmem:[%s4 + $0x4] sm:$0xf]
    %v1186 = vld [vmem:[%s4 + $0x8] sm:$0xf]
    %v1187 = vld [vmem:[%s4 + $0xc] sm:$0xf]
    %v1188 = vld [vmem:[#allocation8] sm:$0xf]
    %v1189 = vld [vmem:[#allocation8 + $0x4] sm:$0xf]
    %v1190 = vld [vmem:[#allocation8 + $0x8] sm:$0xf]
    %v1191 = vld [vmem:[#allocation8 + $0xc] sm:$0xf]
    %v1192 = vld [vmem:[%s6] sm:$0x1]
    %v1193 = vld [vmem:[#allocation3] sm:$0xff]
    %v1194 = vld [vmem:[#allocation3 + $0x8] sm:$0xff]
    %v1195 = vld [vmem:[#allocation3 + $0x10] sm:$0xff]
    %v1196 = vld [vmem:[#allocation3 + $0x18] sm:$0xff]
    %v1197 = vld [vmem:[#allocation3 + $0x20] sm:$0xff]
    %v1198 = vld [vmem:[#allocation3 + $0x28] sm:$0xff]
    %v1199 = vld [vmem:[#allocation3 + $0x30] sm:$0xff]
    %v1200 = vld [vmem:[#allocation3 + $0x38] sm:$0xff]
    %v1202 = vlaneseq
    %v1203 = vshrl.u32 %v1202, 7
    %v1204 = vsub.s32 0, %v1203
    %v1205 = vrot.slane %v1192, %v1204
    %v1211 = vunpack.c.l.b16 %v1184
    %v1212 = vunpack.c.l.b16 %v1185
    %v1213 = vunpack.c.l.b16 %v1186
    %v1214 = vunpack.c.l.b16 %v1187
    %v1215 = vpack.c.b16 %v1212, %v1211
    %v1216 = vpack.c.b16 %v1214, %v1213
    %v1220 = vsel %vm307, %v1193, 0
    %v1223 = vsel %vm307, %v1194, 0
    %v1226 = vsel %vm307, %v1195, 0
    %v1229 = vsel %vm307, %v1196, 0
    %v1232 = vsel %vm307, %v1197, 0
    %v1235 = vsel %vm307, %v1198, 0
    %v1238 = vsel %vm307, %v1199, 0
    %v1241 = vsel %vm307, %v1200, 0
    %1243 = vmatprep.subr.bf16.mxu0 0
    %1244 = vmatpush1.bf16.msra.mxu0 %v1215
    %1245 = vmatprep.subr.bf16.mxu0 0
    %1246 = vmatpush1.bf16.msra.mxu0 %v1216
    %1247 = vmatprep.subr.bf16.mxu0 0
    %1248 = vmatpush1.bf16.msra.mxu0 0
    %1249 = vmatprep.subr.bf16.mxu0 0
    %1250 = vmatpush1.bf16.msra.mxu0 0
    %1251 = vmatprep.subr.bf16.mxu0 0
    %1252 = vmatpush1.bf16.msra.mxu0 0
    %1253 = vmatprep.subr.bf16.mxu0 0
    %1254 = vmatpush1.bf16.msra.mxu0 0
    %1255 = vmatprep.subr.bf16.mxu0 0
    %1256 = vmatpush1.bf16.msra.mxu0 0
    %1257 = vmatprep.subr.bf16.mxu0 0
    %1258 = vmatpush1.bf16.msra.mxu0 0
    %1259 = vmatprep.subr.bf16.mxu0 0
    %1260 = vmatpush1.bf16.msra.mxu0 0
    %1261 = vmatprep.subr.bf16.mxu0 0
    %1262 = vmatpush1.bf16.msra.mxu0 0
    %1263 = vmatprep.subr.bf16.mxu0 0
    %1264 = vmatpush1.bf16.msra.mxu0 0
    %1265 = vmatprep.subr.bf16.mxu0 0
    %1266 = vmatpush1.bf16.msra.mxu0 0
    %1267 = vmatprep.subr.bf16.mxu0 0
    %1268 = vmatpush1.bf16.msra.mxu0 0
    %1269 = vmatprep.subr.bf16.mxu0 0
    %1270 = vmatpush1.bf16.msra.mxu0 0
    %1271 = vmatprep.subr.bf16.mxu0 0
    %1272 = vmatpush1.bf16.msra.mxu0 0
    %1273 = vmatprep.subr.bf16.mxu0 0
    %1274 = vmatpush1.bf16.msra.mxu0 0
    %1275 = vmatprep.mubr.bf16.mxu0 0
    %1276 = vmatmul.mubr.bf16.gmra.mrb[0].mxu0 %v1220
    %v1277 = vpop.f32.mrb[0].mxu0
    %v1278 = vadd.f32 %v1205, %v1277
    %v1279 = vpop.f32.mrb[0].mxu0
    %v1280 = vpop.f32.mrb[0].mxu0
    %v1281 = vadd.f32 %v1205, %v1280
    %v1282 = vpop.f32.mrb[0].mxu0
    %1283 = vmatprep.mubr.bf16.mxu0 0
    %1284 = vmatmul.mubr.bf16.gmra.mrb[0].mxu0 %v1223
    %v1285 = vpop.f32.mrb[0].mxu0
    %v1286 = vadd.f32 %v1205, %v1285
    %v1287 = vpop.f32.mrb[0].mxu0
    %v1288 = vpop.f32.mrb[0].mxu0
    %v1289 = vadd.f32 %v1205, %v1288
    %v1290 = vpop.f32.mrb[0].mxu0
    %1291 = vmatprep.mubr.bf16.mxu0 0
    %1292 = vmatmul.mubr.bf16.gmra.mrb[0].mxu0 %v1226
    %v1293 = vpop.f32.mrb[0].mxu0
    %v1294 = vadd.f32 %v1205, %v1293
    %v1295 = vpop.f32.mrb[0].mxu0
    %v1296 = vpop.f32.mrb[0].mxu0
    %v1297 = vadd.f32 %v1205, %v1296
    %v1298 = vpop.f32.mrb[0].mxu0
    %1299 = vmatprep.mubr.bf16.mxu0 0
    %1300 = vmatmul.mubr.bf16.gmra.mrb[0].mxu0 %v1229
    %v1301 = vpop.f32.mrb[0].mxu0
    %v1302 = vadd.f32 %v1205, %v1301
    %v1303 = vpop.f32.mrb[0].mxu0
    %v1304 = vpop.f32.mrb[0].mxu0
    %v1305 = vadd.f32 %v1205, %v1304
    %v1306 = vpop.f32.mrb[0].mxu0
    %1307 = vmatprep.mubr.bf16.mxu0 0
    %1308 = vmatmul.mubr.bf16.gmra.mrb[0].mxu0 %v1232
    %v1309 = vpop.f32.mrb[0].mxu0
    %v1310 = vadd.f32 %v1205, %v1309
    %v1311 = vpop.f32.mrb[0].mxu0
    %v1312 = vpop.f32.mrb[0].mxu0
    %v1313 = vadd.f32 %v1205, %v1312
    %v1314 = vpop.f32.mrb[0].mxu0
    %1315 = vmatprep.mubr.bf16.mxu0 0
    %1316 = vmatmul.mubr.bf16.gmra.mrb[0].mxu0 %v1235
    %v1317 = vpop.f32.mrb[0].mxu0
    %v1318 = vadd.f32 %v1205, %v1317
    %v1319 = vpop.f32.mrb[0].mxu0
    %v1320 = vpop.f32.mrb[0].mxu0
    %v1321 = vadd.f32 %v1205, %v1320
    %v1322 = vpop.f32.mrb[0].mxu0
    %1323 = vmatprep.mubr.bf16.mxu0 0
    %1324 = vmatmul.mubr.bf16.gmra.mrb[0].mxu0 %v1238
    %v1325 = vpop.f32.mrb[0].mxu0
    %v1326 = vadd.f32 %v1205, %v1325
    %v1327 = vpop.f32.mrb[0].mxu0
    %v1328 = vpop.f32.mrb[0].mxu0
    %v1329 = vadd.f32 %v1205, %v1328
    %v1330 = vpop.f32.mrb[0].mxu0
    %1331 = vmatprep.mubr.bf16.mxu0 0
    %1332 = vmatmul.mubr.bf16.gmra.mrb[0].mxu0 %v1241
    %v1333 = vpop.f32.mrb[0].mxu0
    %v1334 = vadd.f32 %v1205, %v1333
    %v1335 = vpop.f32.mrb[0].mxu0
    %v1336 = vpop.f32.mrb[0].mxu0
    %v1337 = vadd.f32 %v1205, %v1336
    %v1338 = vpop.f32.mrb[0].mxu0
    %1339 = vdwg.mxu0
    %1340 = vst [vmem:[#allocation2] sm:$0xff] %v1278
    %1341 = vst [vmem:[#allocation2 + $0x8] sm:$0xff] %v1281
    %1342 = vst [vmem:[#allocation2 + $0x10] sm:$0xff] %v1286
    %1343 = vst [vmem:[#allocation2 + $0x18] sm:$0xff] %v1289
    %1344 = vst [vmem:[#allocation2 + $0x20] sm:$0xff] %v1294
    %1345 = vst [vmem:[#allocation2 + $0x28] sm:$0xff] %v1297
    %1346 = vst [vmem:[#allocation2 + $0x30] sm:$0xff] %v1302
    %1347 = vst [vmem:[#allocation2 + $0x38] sm:$0xff] %v1305
    %1348 = vst [vmem:[#allocation2 + $0x40] sm:$0xff] %v1310
    %1349 = vst [vmem:[#allocation2 + $0x48] sm:$0xff] %v1313
    %1350 = vst [vmem:[#allocation2 + $0x50] sm:$0xff] %v1318
    %1351 = vst [vmem:[#allocation2 + $0x58] sm:$0xff] %v1321
    %1352 = vst [vmem:[#allocation2 + $0x60] sm:$0xff] %v1326
    %1353 = vst [vmem:[#allocation2 + $0x68] sm:$0xff] %v1329
    %1354 = vst [vmem:[#allocation2 + $0x70] sm:$0xff] %v1334
    %1355 = vst [vmem:[#allocation2 + $0x78] sm:$0xff] %v1337
    %v1356 = vld [vmem:[#allocation2] sm:$0xff]
    %v1357 = vld [vmem:[#allocation2 + $0x8] sm:$0xff]
    %v1362 = vunpack.c.l.b16 %v1188
    %v1363 = vunpack.c.l.b16 %v1189
    %v1364 = vunpack.c.l.b16 %v1190
    %v1365 = vunpack.c.l.b16 %v1191
    %v1366 = vpack.c.b16 %v1363, %v1362
    %v1367 = vpack.c.b16 %v1365, %v1364
    %1370 = vmatprep.subr.bf16.mxu0 0
    %1371 = vmatpush1.bf16.msra.mxu0 %v1366
    %1372 = vmatprep.subr.bf16.mxu0 0
    %1373 = vmatpush1.bf16.msra.mxu0 %v1367
    %1374 = vmatprep.subr.bf16.mxu0 0
    %1375 = vmatpush1.bf16.msra.mxu0 0
    %1376 = vmatprep.subr.bf16.mxu0 0
    %1377 = vmatpush1.bf16.msra.mxu0 0
    %1378 = vmatprep.subr.bf16.mxu0 0
    %1379 = vmatpush1.bf16.msra.mxu0 0
    %1380 = vmatprep.subr.bf16.mxu0 0
    %1381 = vmatpush1.bf16.msra.mxu0 0
    %1382 = vmatprep.subr.bf16.mxu0 0
    %1383 = vmatpush1.bf16.msra.mxu0 0
    %1384 = vmatprep.subr.bf16.mxu0 0
    %1385 = vmatpush1.bf16.msra.mxu0 0
    %1386 = vmatprep.subr.bf16.mxu0 0
    %1387 = vmatpush1.bf16.msra.mxu0 0
    %1388 = vmatprep.subr.bf16.mxu0 0
    %1389 = vmatpush1.bf16.msra.mxu0 0
    %1390 = vmatprep.subr.bf16.mxu0 0
    %1391 = vmatpush1.bf16.msra.mxu0 0
    %1392 = vmatprep.subr.bf16.mxu0 0
    %1393 = vmatpush1.bf16.msra.mxu0 0
    %1394 = vmatprep.subr.bf16.mxu0 0
    %1395 = vmatpush1.bf16.msra.mxu0 0
    %1396 = vmatprep.subr.bf16.mxu0 0
    %1397 = vmatpush1.bf16.msra.mxu0 0
    %1398 = vmatprep.subr.bf16.mxu0 0
    %1399 = vmatpush1.bf16.msra.mxu0 0
    %1400 = vmatprep.subr.bf16.mxu0 0
    %1401 = vmatpush1.bf16.msra.mxu0 0
    %1402 = vmatprep.mubr.bf16.mxu0 0
    %1403 = vmatmul.mubr.bf16.gmra.mrb[0].mxu0 %v309
    %v1404 = vpop.f32.mrb[0].mxu0
    %v1405 = vadd.f32 0.0, %v1404
    %v1406 = vpop.f32.mrb[0].mxu0
    %v1407 = vpop.f32.mrb[0].mxu0
    %v1408 = vadd.f32 0.0, %v1407
    %v1409 = vpop.f32.mrb[0].mxu0
    %1410 = vdwg.mxu0
    %v1411 = vadd.f32 %v1356, %v1405
    %v1412 = vadd.f32 %v1357, %v1408
    %v1413 = vmul.f32 %v1411, %v79
    %v1414 = vmul.f32 %v1412, %v79
    %v1415 = vxor.u32 %v1413, 2147483648
    %v1416 = vxor.u32 %v1414, 2147483648
    %v1417 = vmul.f32 %v1415, 1.442695
    %v1418 = vpow.pop %v1417
    %v1419 = vmul.f32 %v1416, 1.442695
    %v1420 = vpow.pop %v1419
    %v1421 = vadd.f32 %v1418, 1.0
    %v1422 = vadd.f32 %v1420, 1.0
    %v1423 = vrcp.pop %v1421
    %v1424 = vmul.f32 1.0, %v1423
    %v1425 = vrcp.pop %v1422
    %v1426 = vmul.f32 1.0, %v1425
    %v1427 = vmul.f32 %v1424, 2.0
    %v1428 = vmul.f32 %v1426, 2.0
    %v1429 = vsub.f32 %v1427, 1.0
    %v1430 = vsub.f32 %v1428, 1.0
    %v1431 = vsel %vm78, %v1429, %v1424
    %v1432 = vsel %vm78, %v1430, %v1426
    %v1433 = vmul.f32 %v1431, 0.0
    %v1434 = vmul.f32 %v1432, 0.0
    %1437 = vrot.lane.b32.xlu0 %v1431, 64
    %v1438 = vpop.permute.xlu0 %1437
    %1439 = vrot.lane.b32.xlu0 %v1432, 64
    %v1440 = vpop.permute.xlu0 %1439
    %v1443 = vmul.f32 %v1431, %v1438
    %v1444 = vmul.f32 %v1432, %v1440
    %1447 = vrot.lane.b32.xlu0 %v1443, 32
    %v1448 = vpop.permute.xlu0 %1447
    %1449 = vrot.lane.b32.xlu0 %v1444, 32
    %v1450 = vpop.permute.xlu0 %1449
    %v1453 = vadd.f32 %v1433, %v1448
    %v1454 = vadd.f32 %v1434, %v1450
    %v1455 = vtanh.pop %v1453
    %v1456 = vtanh.pop %v1454
    %1459 = vrot.lane.b32.xlu0 %v1455, 64
    %v1460 = vpop.permute.xlu0 %1459
    %1461 = vrot.lane.b32.xlu0 %v1456, 64
    %v1462 = vpop.permute.xlu0 %1461
    %v1465 = vmul.f32 %v1431, %v1460
    %v1466 = vmul.f32 %v1432, %v1462
    %v1467 = vpack.c.bf16 %v1466, %v1465
    %v1468 = vld [vmem:[%s414] sm:$0xff]
    %v1469 = vld [vmem:[%s414 + $0x8] sm:$0xff]
    %1471 = vrot.lane.b32.xlu0 %v1467, 32
    %v1472 = vpop.permute.xlu0 %1471
    %v1474 = vsel %vm307, %v1472, 0
    %1476 = vmatprep.subr.bf16.mxu0 0
    %1477 = vmatpush1.bf16.msra.mxu0 %v1366
    %1478 = vmatprep.subr.bf16.mxu0 0
    %1479 = vmatpush1.bf16.msra.mxu0 %v1367
    %1480 = vmatprep.subr.bf16.mxu0 0
    %1481 = vmatpush1.bf16.msra.mxu0 0
    %1482 = vmatprep.subr.bf16.mxu0 0
    %1483 = vmatpush1.bf16.msra.mxu0 0
    %1484 = vmatprep.subr.bf16.mxu0 0
    %1485 = vmatpush1.bf16.msra.mxu0 0
    %1486 = vmatprep.subr.bf16.mxu0 0
    %1487 = vmatpush1.bf16.msra.mxu0 0
    %1488 = vmatprep.subr.bf16.mxu0 0
    %1489 = vmatpush1.bf16.msra.mxu0 0
    %1490 = vmatprep.subr.bf16.mxu0 0
    %1491 = vmatpush1.bf16.msra.mxu0 0
    %1492 = vmatprep.subr.bf16.mxu0 0
    %1493 = vmatpush1.bf16.msra.mxu0 0
    %1494 = vmatprep.subr.bf16.mxu0 0
    %1495 = vmatpush1.bf16.msra.mxu0 0
    %1496 = vmatprep.subr.bf16.mxu0 0
    %1497 = vmatpush1.bf16.msra.mxu0 0
    %1498 = vmatprep.subr.bf16.mxu0 0
    %1499 = vmatpush1.bf16.msra.mxu0 0
    %1500 = vmatprep.subr.bf16.mxu0 0
    %1501 = vmatpush1.bf16.msra.mxu0 0
    %1502 = vmatprep.subr.bf16.mxu0 0
    %1503 = vmatpush1.bf16.msra.mxu0 0
    %1504 = vmatprep.subr.bf16.mxu0 0
    %1505 = vmatpush1.bf16.msra.mxu0 0
    %1506 = vmatprep.subr.bf16.mxu0 0
    %1507 = vmatpush1.bf16.msra.mxu0 0
    %1508 = vmatprep.mubr.bf16.mxu0 0
    %1509 = vmatmul.mubr.bf16.gmra.mrb[0].mxu0 %v1474
    %v1510 = vpop.f32.mrb[0].mxu0
    %v1511 = vadd.f32 0.0, %v1510
    %v1512 = vpop.f32.mrb[0].mxu0
    %v1513 = vpop.f32.mrb[0].mxu0
    %v1514 = vadd.f32 0.0, %v1513
    %v1515 = vpop.f32.mrb[0].mxu0
    %1516 = vdwg.mxu0
    %v1517 = vadd.f32 %v1468, %v1511
    %v1518 = vadd.f32 %v1469, %v1514
    %v1519 = vmul.f32 %v1517, %v79
    %v1520 = vmul.f32 %v1518, %v79
    %v1521 = vxor.u32 %v1519, 2147483648
    %v1522 = vxor.u32 %v1520, 2147483648
    %v1523 = vmul.f32 %v1521, 1.442695
    %v1524 = vpow.pop %v1523
    %v1525 = vmul.f32 %v1522, 1.442695
    %v1526 = vpow.pop %v1525
    %v1527 = vadd.f32 %v1524, 1.0
    %v1528 = vadd.f32 %v1526, 1.0
    %v1529 = vrcp.pop %v1527
    %v1530 = vmul.f32 1.0, %v1529
    %v1531 = vrcp.pop %v1528
    %v1532 = vmul.f32 1.0, %v1531
    %v1533 = vmul.f32 %v1530, 2.0
    %v1534 = vmul.f32 %v1532, 2.0
    %v1535 = vsub.f32 %v1533, 1.0
    %v1536 = vsub.f32 %v1534, 1.0
    %v1537 = vsel %vm78, %v1535, %v1530
    %v1538 = vsel %vm78, %v1536, %v1532
    %v1539 = vmul.f32 %v1537, %v1453
    %v1540 = vmul.f32 %v1538, %v1454
    %1543 = vrot.lane.b32.xlu0 %v1537, 64
    %v1544 = vpop.permute.xlu0 %1543
    %1545 = vrot.lane.b32.xlu0 %v1538, 64
    %v1546 = vpop.permute.xlu0 %1545
    %v1549 = vmul.f32 %v1537, %v1544
    %v1550 = vmul.f32 %v1538, %v1546
    %1553 = vrot.lane.b32.xlu0 %v1549, 32
    %v1554 = vpop.permute.xlu0 %1553
    %1555 = vrot.lane.b32.xlu0 %v1550, 32
    %v1556 = vpop.permute.xlu0 %1555
    %v1559 = vadd.f32 %v1539, %v1554
    %v1560 = vadd.f32 %v1540, %v1556
    %v1561 = vtanh.pop %v1559
    %v1562 = vtanh.pop %v1560
    %1565 = vrot.lane.b32.xlu0 %v1561, 64
    %v1566 = vpop.permute.xlu0 %1565
    %1567 = vrot.lane.b32.xlu0 %v1562, 64
    %v1568 = vpop.permute.xlu0 %1567
    %v1571 = vmul.f32 %v1537, %v1566
    %v1572 = vmul.f32 %v1538, %v1568
    %v1573 = vpack.c.bf16 %v1572, %v1571
    %v1574 = vld [vmem:[%s524] sm:$0xff]
    %v1575 = vld [vmem:[%s524 + $0x8] sm:$0xff]
    %1577 = vrot.lane.b32.xlu0 %v1573, 32
    %v1578 = vpop.permute.xlu0 %1577
    %v1580 = vsel %vm307, %v1578, 0
    %1582 = vmatprep.subr.bf16.mxu0 0
    %1583 = vmatpush1.bf16.msra.mxu0 %v1366
    %1584 = vmatprep.subr.bf16.mxu0 0
    %1585 = vmatpush1.bf16.msra.mxu0 %v1367
    %1586 = vmatprep.subr.bf16.mxu0 0
    %1587 = vmatpush1.bf16.msra.mxu0 0
    %1588 = vmatprep.subr.bf16.mxu0 0
    %1589 = vmatpush1.bf16.msra.mxu0 0
    %1590 = vmatprep.subr.bf16.mxu0 0
    %1591 = vmatpush1.bf16.msra.mxu0 0
    %1592 = vmatprep.subr.bf16.mxu0 0
    %1593 = vmatpush1.bf16.msra.mxu0 0
    %1594 = vmatprep.subr.bf16.mxu0 0
    %1595 = vmatpush1.bf16.msra.mxu0 0
    %1596 = vmatprep.subr.bf16.mxu0 0
    %1597 = vmatpush1.bf16.msra.mxu0 0
    %1598 = vmatprep.subr.bf16.mxu0 0
    %1599 = vmatpush1.bf16.msra.mxu0 0
    %1600 = vmatprep.subr.bf16.mxu0 0
    %1601 = vmatpush1.bf16.msra.mxu0 0
    %1602 = vmatprep.subr.bf16.mxu0 0
    %1603 = vmatpush1.bf16.msra.mxu0 0
    %1604 = vmatprep.subr.bf16.mxu0 0
    %1605 = vmatpush1.bf16.msra.mxu0 0
    %1606 = vmatprep.subr.bf16.mxu0 0
    %1607 = vmatpush1.bf16.msra.mxu0 0
    %1608 = vmatprep.subr.bf16.mxu0 0
    %1609 = vmatpush1.bf16.msra.mxu0 0
    %1610 = vmatprep.subr.bf16.mxu0 0
    %1611 = vmatpush1.bf16.msra.mxu0 0
    %1612 = vmatprep.subr.bf16.mxu0 0
    %1613 = vmatpush1.bf16.msra.mxu0 0
    %1614 = vmatprep.mubr.bf16.mxu0 0
    %1615 = vmatmul.mubr.bf16.gmra.mrb[0].mxu0 %v1580
    %v1616 = vpop.f32.mrb[0].mxu0
    %v1617 = vadd.f32 0.0, %v1616
    %v1618 = vpop.f32.mrb[0].mxu0
    %v1619 = vpop.f32.mrb[0].mxu0
    %v1620 = vadd.f32 0.0, %v1619
    %v1621 = vpop.f32.mrb[0].mxu0
    %1622 = vdwg.mxu0
    %v1623 = vadd.f32 %v1574, %v1617
    %v1624 = vadd.f32 %v1575, %v1620
    %v1625 = vmul.f32 %v1623, %v79
    %v1626 = vmul.f32 %v1624, %v79
    %v1627 = vxor.u32 %v1625, 2147483648
    %v1628 = vxor.u32 %v1626, 2147483648
    %v1629 = vmul.f32 %v1627, 1.442695
    %v1630 = vpow.pop %v1629
    %v1631 = vmul.f32 %v1628, 1.442695
    %v1632 = vpow.pop %v1631
    %v1633 = vadd.f32 %v1630, 1.0
    %v1634 = vadd.f32 %v1632, 1.0
    %v1635 = vrcp.pop %v1633
    %v1636 = vmul.f32 1.0, %v1635
    %v1637 = vrcp.pop %v1634
    %v1638 = vmul.f32 1.0, %v1637
    %v1639 = vmul.f32 %v1636, 2.0
    %v1640 = vmul.f32 %v1638, 2.0
    %v1641 = vsub.f32 %v1639, 1.0
    %v1642 = vsub.f32 %v1640, 1.0
    %v1643 = vsel %vm78, %v1641, %v1636
    %v1644 = vsel %vm78, %v1642, %v1638
    %v1645 = vmul.f32 %v1643, %v1559
    %v1646 = vmul.f32 %v1644, %v1560
    %1649 = vrot.lane.b32.xlu0 %v1643, 64
    %v1650 = vpop.permute.xlu0 %1649
    %1651 = vrot.lane.b32.xlu0 %v1644, 64
    %v1652 = vpop.permute.xlu0 %1651
    %v1655 = vmul.f32 %v1643, %v1650
    %v1656 = vmul.f32 %v1644, %v1652
    %1659 = vrot.lane.b32.xlu0 %v1655, 32
    %v1660 = vpop.permute.xlu0 %1659
    %1661 = vrot.lane.b32.xlu0 %v1656, 32
    %v1662 = vpop.permute.xlu0 %1661
    %v1665 = vadd.f32 %v1645, %v1660
    %v1666 = vadd.f32 %v1646, %v1662
    %v1667 = vtanh.pop %v1665
    %v1668 = vtanh.pop %v1666
    %1671 = vrot.lane.b32.xlu0 %v1667, 64
    %v1672 = vpop.permute.xlu0 %1671
    %1673 = vrot.lane.b32.xlu0 %v1668, 64
    %v1674 = vpop.permute.xlu0 %1673
    %v1677 = vmul.f32 %v1643, %v1672
    %v1678 = vmul.f32 %v1644, %v1674
    %v1679 = vpack.c.bf16 %v1678, %v1677
    %v1680 = vld [vmem:[%s634] sm:$0xff]
    %v1681 = vld [vmem:[%s634 + $0x8] sm:$0xff]
    %1683 = vrot.lane.b32.xlu0 %v1679, 32
    %v1684 = vpop.permute.xlu0 %1683
    %v1686 = vsel %vm307, %v1684, 0
    %1688 = vmatprep.subr.bf16.mxu0 0
    %1689 = vmatpush1.bf16.msra.mxu0 %v1366
    %1690 = vmatprep.subr.bf16.mxu0 0
    %1691 = vmatpush1.bf16.msra.mxu0 %v1367
    %1692 = vmatprep.subr.bf16.mxu0 0
    %1693 = vmatpush1.bf16.msra.mxu0 0
    %1694 = vmatprep.subr.bf16.mxu0 0
    %1695 = vmatpush1.bf16.msra.mxu0 0
    %1696 = vmatprep.subr.bf16.mxu0 0
    %1697 = vmatpush1.bf16.msra.mxu0 0
    %1698 = vmatprep.subr.bf16.mxu0 0
    %1699 = vmatpush1.bf16.msra.mxu0 0
    %1700 = vmatprep.subr.bf16.mxu0 0
    %1701 = vmatpush1.bf16.msra.mxu0 0
    %1702 = vmatprep.subr.bf16.mxu0 0
    %1703 = vmatpush1.bf16.msra.mxu0 0
    %1704 = vmatprep.subr.bf16.mxu0 0
    %1705 = vmatpush1.bf16.msra.mxu0 0
    %1706 = vmatprep.subr.bf16.mxu0 0
    %1707 = vmatpush1.bf16.msra.mxu0 0
    %1708 = vmatprep.subr.bf16.mxu0 0
    %1709 = vmatpush1.bf16.msra.mxu0 0
    %1710 = vmatprep.subr.bf16.mxu0 0
    %1711 = vmatpush1.bf16.msra.mxu0 0
    %1712 = vmatprep.subr.bf16.mxu0 0
    %1713 = vmatpush1.bf16.msra.mxu0 0
    %1714 = vmatprep.subr.bf16.mxu0 0
    %1715 = vmatpush1.bf16.msra.mxu0 0
    %1716 = vmatprep.subr.bf16.mxu0 0
    %1717 = vmatpush1.bf16.msra.mxu0 0
    %1718 = vmatprep.subr.bf16.mxu0 0
    %1719 = vmatpush1.bf16.msra.mxu0 0
    %1720 = vmatprep.mubr.bf16.mxu0 0
    %1721 = vmatmul.mubr.bf16.gmra.mrb[0].mxu0 %v1686
    %v1722 = vpop.f32.mrb[0].mxu0
    %v1723 = vadd.f32 0.0, %v1722
    %v1724 = vpop.f32.mrb[0].mxu0
    %v1725 = vpop.f32.mrb[0].mxu0
    %v1726 = vadd.f32 0.0, %v1725
    %v1727 = vpop.f32.mrb[0].mxu0
    %1728 = vdwg.mxu0
    %v1729 = vadd.f32 %v1680, %v1723
    %v1730 = vadd.f32 %v1681, %v1726
    %v1731 = vmul.f32 %v1729, %v79
    %v1732 = vmul.f32 %v1730, %v79
    %v1733 = vxor.u32 %v1731, 2147483648
    %v1734 = vxor.u32 %v1732, 2147483648
    %v1735 = vmul.f32 %v1733, 1.442695
    %v1736 = vpow.pop %v1735
    %v1737 = vmul.f32 %v1734, 1.442695
    %v1738 = vpow.pop %v1737
    %v1739 = vadd.f32 %v1736, 1.0
    %v1740 = vadd.f32 %v1738, 1.0
    %v1741 = vrcp.pop %v1739
    %v1742 = vmul.f32 1.0, %v1741
    %v1743 = vrcp.pop %v1740
    %v1744 = vmul.f32 1.0, %v1743
    %v1745 = vmul.f32 %v1742, 2.0
    %v1746 = vmul.f32 %v1744, 2.0
    %v1747 = vsub.f32 %v1745, 1.0
    %v1748 = vsub.f32 %v1746, 1.0
    %v1749 = vsel %vm78, %v1747, %v1742
    %v1750 = vsel %vm78, %v1748, %v1744
    %v1751 = vmul.f32 %v1749, %v1665
    %v1752 = vmul.f32 %v1750, %v1666
    %1755 = vrot.lane.b32.xlu0 %v1749, 64
    %v1756 = vpop.permute.xlu0 %1755
    %1757 = vrot.lane.b32.xlu0 %v1750, 64
    %v1758 = vpop.permute.xlu0 %1757
    %v1761 = vmul.f32 %v1749, %v1756
    %v1762 = vmul.f32 %v1750, %v1758
    %1765 = vrot.lane.b32.xlu0 %v1761, 32
    %v1766 = vpop.permute.xlu0 %1765
    %1767 = vrot.lane.b32.xlu0 %v1762, 32
    %v1768 = vpop.permute.xlu0 %1767
    %v1771 = vadd.f32 %v1751, %v1766
    %v1772 = vadd.f32 %v1752, %v1768
    %v1773 = vtanh.pop %v1771
    %v1774 = vtanh.pop %v1772
    %1777 = vrot.lane.b32.xlu0 %v1773, 64
    %v1778 = vpop.permute.xlu0 %1777
    %1779 = vrot.lane.b32.xlu0 %v1774, 64
    %v1780 = vpop.permute.xlu0 %1779
    %v1783 = vmul.f32 %v1749, %v1778
    %v1784 = vmul.f32 %v1750, %v1780
    %v1785 = vpack.c.bf16 %v1784, %v1783
    %v1786 = vld [vmem:[%s744] sm:$0xff]
    %v1787 = vld [vmem:[%s744 + $0x8] sm:$0xff]
    %1789 = vrot.lane.b32.xlu0 %v1785, 32
    %v1790 = vpop.permute.xlu0 %1789
    %v1792 = vsel %vm307, %v1790, 0
    %1794 = vmatprep.subr.bf16.mxu0 0
    %1795 = vmatpush1.bf16.msra.mxu0 %v1366
    %1796 = vmatprep.subr.bf16.mxu0 0
    %1797 = vmatpush1.bf16.msra.mxu0 %v1367
    %1798 = vmatprep.subr.bf16.mxu0 0
    %1799 = vmatpush1.bf16.msra.mxu0 0
    %1800 = vmatprep.subr.bf16.mxu0 0
    %1801 = vmatpush1.bf16.msra.mxu0 0
    %1802 = vmatprep.subr.bf16.mxu0 0
    %1803 = vmatpush1.bf16.msra.mxu0 0
    %1804 = vmatprep.subr.bf16.mxu0 0
    %1805 = vmatpush1.bf16.msra.mxu0 0
    %1806 = vmatprep.subr.bf16.mxu0 0
    %1807 = vmatpush1.bf16.msra.mxu0 0
    %1808 = vmatprep.subr.bf16.mxu0 0
    %1809 = vmatpush1.bf16.msra.mxu0 0
    %1810 = vmatprep.subr.bf16.mxu0 0
    %1811 = vmatpush1.bf16.msra.mxu0 0
    %1812 = vmatprep.subr.bf16.mxu0 0
    %1813 = vmatpush1.bf16.msra.mxu0 0
    %1814 = vmatprep.subr.bf16.mxu0 0
    %1815 = vmatpush1.bf16.msra.mxu0 0
    %1816 = vmatprep.subr.bf16.mxu0 0
    %1817 = vmatpush1.bf16.msra.mxu0 0
    %1818 = vmatprep.subr.bf16.mxu0 0
    %1819 = vmatpush1.bf16.msra.mxu0 0
    %1820 = vmatprep.subr.bf16.mxu0 0
    %1821 = vmatpush1.bf16.msra.mxu0 0
    %1822 = vmatprep.subr.bf16.mxu0 0
    %1823 = vmatpush1.bf16.msra.mxu0 0
    %1824 = vmatprep.subr.bf16.mxu0 0
    %1825 = vmatpush1.bf16.msra.mxu0 0
    %1826 = vmatprep.mubr.bf16.mxu0 0
    %1827 = vmatmul.mubr.bf16.gmra.mrb[0].mxu0 %v1792
    %v1828 = vpop.f32.mrb[0].mxu0
    %v1829 = vadd.f32 0.0, %v1828
    %v1830 = vpop.f32.mrb[0].mxu0
    %v1831 = vpop.f32.mrb[0].mxu0
    %v1832 = vadd.f32 0.0, %v1831
    %v1833 = vpop.f32.mrb[0].mxu0
    %1834 = vdwg.mxu0
    %v1835 = vadd.f32 %v1786, %v1829
    %v1836 = vadd.f32 %v1787, %v1832
    %v1837 = vmul.f32 %v1835, %v79
    %v1838 = vmul.f32 %v1836, %v79
    %v1839 = vxor.u32 %v1837, 2147483648
    %v1840 = vxor.u32 %v1838, 2147483648
    %v1841 = vmul.f32 %v1839, 1.442695
    %v1842 = vpow.pop %v1841
    %v1843 = vmul.f32 %v1840, 1.442695
    %v1844 = vpow.pop %v1843
    %v1845 = vadd.f32 %v1842, 1.0
    %v1846 = vadd.f32 %v1844, 1.0
    %v1847 = vrcp.pop %v1845
    %v1848 = vmul.f32 1.0, %v1847
    %v1849 = vrcp.pop %v1846
    %v1850 = vmul.f32 1.0, %v1849
    %v1851 = vmul.f32 %v1848, 2.0
    %v1852 = vmul.f32 %v1850, 2.0
    %v1853 = vsub.f32 %v1851, 1.0
    %v1854 = vsub.f32 %v1852, 1.0
    %v1855 = vsel %vm78, %v1853, %v1848
    %v1856 = vsel %vm78, %v1854, %v1850
    %v1857 = vmul.f32 %v1855, %v1771
    %v1858 = vmul.f32 %v1856, %v1772
    %1861 = vrot.lane.b32.xlu0 %v1855, 64
    %v1862 = vpop.permute.xlu0 %1861
    %1863 = vrot.lane.b32.xlu0 %v1856, 64
    %v1864 = vpop.permute.xlu0 %1863
    %v1867 = vmul.f32 %v1855, %v1862
    %v1868 = vmul.f32 %v1856, %v1864
    %1871 = vrot.lane.b32.xlu0 %v1867, 32
    %v1872 = vpop.permute.xlu0 %1871
    %1873 = vrot.lane.b32.xlu0 %v1868, 32
    %v1874 = vpop.permute.xlu0 %1873
    %v1877 = vadd.f32 %v1857, %v1872
    %v1878 = vadd.f32 %v1858, %v1874
    %v1879 = vtanh.pop %v1877
    %v1880 = vtanh.pop %v1878
    %1883 = vrot.lane.b32.xlu0 %v1879, 64
    %v1884 = vpop.permute.xlu0 %1883
    %1885 = vrot.lane.b32.xlu0 %v1880, 64
    %v1886 = vpop.permute.xlu0 %1885
    %v1889 = vmul.f32 %v1855, %v1884
    %v1890 = vmul.f32 %v1856, %v1886
    %v1891 = vpack.c.bf16 %v1890, %v1889
    %v1892 = vld [vmem:[%s854] sm:$0xff]
    %v1893 = vld [vmem:[%s854 + $0x8] sm:$0xff]
    %1895 = vrot.lane.b32.xlu0 %v1891, 32
    %v1896 = vpop.permute.xlu0 %1895
    %v1898 = vsel %vm307, %v1896, 0
    %1900 = vmatprep.subr.bf16.mxu0 0
    %1901 = vmatpush1.bf16.msra.mxu0 %v1366
    %1902 = vmatprep.subr.bf16.mxu0 0
    %1903 = vmatpush1.bf16.msra.mxu0 %v1367
    %1904 = vmatprep.subr.bf16.mxu0 0
    %1905 = vmatpush1.bf16.msra.mxu0 0
    %1906 = vmatprep.subr.bf16.mxu0 0
    %1907 = vmatpush1.bf16.msra.mxu0 0
    %1908 = vmatprep.subr.bf16.mxu0 0
    %1909 = vmatpush1.bf16.msra.mxu0 0
    %1910 = vmatprep.subr.bf16.mxu0 0
    %1911 = vmatpush1.bf16.msra.mxu0 0
    %1912 = vmatprep.subr.bf16.mxu0 0
    %1913 = vmatpush1.bf16.msra.mxu0 0
    %1914 = vmatprep.subr.bf16.mxu0 0
    %1915 = vmatpush1.bf16.msra.mxu0 0
    %1916 = vmatprep.subr.bf16.mxu0 0
    %1917 = vmatpush1.bf16.msra.mxu0 0
    %1918 = vmatprep.subr.bf16.mxu0 0
    %1919 = vmatpush1.bf16.msra.mxu0 0
    %1920 = vmatprep.subr.bf16.mxu0 0
    %1921 = vmatpush1.bf16.msra.mxu0 0
    %1922 = vmatprep.subr.bf16.mxu0 0
    %1923 = vmatpush1.bf16.msra.mxu0 0
    %1924 = vmatprep.subr.bf16.mxu0 0
    %1925 = vmatpush1.bf16.msra.mxu0 0
    %1926 = vmatprep.subr.bf16.mxu0 0
    %1927 = vmatpush1.bf16.msra.mxu0 0
    %1928 = vmatprep.subr.bf16.mxu0 0
    %1929 = vmatpush1.bf16.msra.mxu0 0
    %1930 = vmatprep.subr.bf16.mxu0 0
    %1931 = vmatpush1.bf16.msra.mxu0 0
    %1932 = vmatprep.mubr.bf16.mxu0 0
    %1933 = vmatmul.mubr.bf16.gmra.mrb[0].mxu0 %v1898
    %v1934 = vpop.f32.mrb[0].mxu0
    %v1935 = vadd.f32 0.0, %v1934
    %v1936 = vpop.f32.mrb[0].mxu0
    %v1937 = vpop.f32.mrb[0].mxu0
    %v1938 = vadd.f32 0.0, %v1937
    %v1939 = vpop.f32.mrb[0].mxu0
    %1940 = vdwg.mxu0
    %v1941 = vadd.f32 %v1892, %v1935
    %v1942 = vadd.f32 %v1893, %v1938
    %v1943 = vmul.f32 %v1941, %v79
    %v1944 = vmul.f32 %v1942, %v79
    %v1945 = vxor.u32 %v1943, 2147483648
    %v1946 = vxor.u32 %v1944, 2147483648
    %v1947 = vmul.f32 %v1945, 1.442695
    %v1948 = vpow.pop %v1947
    %v1949 = vmul.f32 %v1946, 1.442695
    %v1950 = vpow.pop %v1949
    %v1951 = vadd.f32 %v1948, 1.0
    %v1952 = vadd.f32 %v1950, 1.0
    %v1953 = vrcp.pop %v1951
    %v1954 = vmul.f32 1.0, %v1953
    %v1955 = vrcp.pop %v1952
    %v1956 = vmul.f32 1.0, %v1955
    %v1957 = vmul.f32 %v1954, 2.0
    %v1958 = vmul.f32 %v1956, 2.0
    %v1959 = vsub.f32 %v1957, 1.0
    %v1960 = vsub.f32 %v1958, 1.0
    %v1961 = vsel %vm78, %v1959, %v1954
    %v1962 = vsel %vm78, %v1960, %v1956
    %v1963 = vmul.f32 %v1961, %v1877
    %v1964 = vmul.f32 %v1962, %v1878
    %1967 = vrot.lane.b32.xlu0 %v1961, 64
    %v1968 = vpop.permute.xlu0 %1967
    %1969 = vrot.lane.b32.xlu0 %v1962, 64
    %v1970 = vpop.permute.xlu0 %1969
    %v1973 = vmul.f32 %v1961, %v1968
    %v1974 = vmul.f32 %v1962, %v1970
    %1977 = vrot.lane.b32.xlu0 %v1973, 32
    %v1978 = vpop.permute.xlu0 %1977
    %1979 = vrot.lane.b32.xlu0 %v1974, 32
    %v1980 = vpop.permute.xlu0 %1979
    %v1983 = vadd.f32 %v1963, %v1978
    %v1984 = vadd.f32 %v1964, %v1980
    %v1985 = vtanh.pop %v1983
    %v1986 = vtanh.pop %v1984
    %1989 = vrot.lane.b32.xlu0 %v1985, 64
    %v1990 = vpop.permute.xlu0 %1989
    %1991 = vrot.lane.b32.xlu0 %v1986, 64
    %v1992 = vpop.permute.xlu0 %1991
    %v1995 = vmul.f32 %v1961, %v1990
    %v1996 = vmul.f32 %v1962, %v1992
    %v1997 = vpack.c.bf16 %v1996, %v1995
    %v1998 = vld [vmem:[%s964] sm:$0xff]
    %v1999 = vld [vmem:[%s964 + $0x8] sm:$0xff]
    %2001 = vrot.lane.b32.xlu0 %v1997, 32
    %v2002 = vpop.permute.xlu0 %2001
    %v2004 = vsel %vm307, %v2002, 0
    %2006 = vmatprep.subr.bf16.mxu0 0
    %2007 = vmatpush1.bf16.msra.mxu0 %v1366
    %2008 = vmatprep.subr.bf16.mxu0 0
    %2009 = vmatpush1.bf16.msra.mxu0 %v1367
    %2010 = vmatprep.subr.bf16.mxu0 0
    %2011 = vmatpush1.bf16.msra.mxu0 0
    %2012 = vmatprep.subr.bf16.mxu0 0
    %2013 = vmatpush1.bf16.msra.mxu0 0
    %2014 = vmatprep.subr.bf16.mxu0 0
    %2015 = vmatpush1.bf16.msra.mxu0 0
    %2016 = vmatprep.subr.bf16.mxu0 0
    %2017 = vmatpush1.bf16.msra.mxu0 0
    %2018 = vmatprep.subr.bf16.mxu0 0
    %2019 = vmatpush1.bf16.msra.mxu0 0
    %2020 = vmatprep.subr.bf16.mxu0 0
    %2021 = vmatpush1.bf16.msra.mxu0 0
    %2022 = vmatprep.subr.bf16.mxu0 0
    %2023 = vmatpush1.bf16.msra.mxu0 0
    %2024 = vmatprep.subr.bf16.mxu0 0
    %2025 = vmatpush1.bf16.msra.mxu0 0
    %2026 = vmatprep.subr.bf16.mxu0 0
    %2027 = vmatpush1.bf16.msra.mxu0 0
    %2028 = vmatprep.subr.bf16.mxu0 0
    %2029 = vmatpush1.bf16.msra.mxu0 0
    %2030 = vmatprep.subr.bf16.mxu0 0
    %2031 = vmatpush1.bf16.msra.mxu0 0
    %2032 = vmatprep.subr.bf16.mxu0 0
    %2033 = vmatpush1.bf16.msra.mxu0 0
    %2034 = vmatprep.subr.bf16.mxu0 0
    %2035 = vmatpush1.bf16.msra.mxu0 0
    %2036 = vmatprep.subr.bf16.mxu0 0
    %2037 = vmatpush1.bf16.msra.mxu0 0
    %2038 = vmatprep.mubr.bf16.mxu0 0
    %2039 = vmatmul.mubr.bf16.gmra.mrb[0].mxu0 %v2004
    %v2040 = vpop.f32.mrb[0].mxu0
    %v2041 = vadd.f32 0.0, %v2040
    %v2042 = vpop.f32.mrb[0].mxu0
    %v2043 = vpop.f32.mrb[0].mxu0
    %v2044 = vadd.f32 0.0, %v2043
    %v2045 = vpop.f32.mrb[0].mxu0
    %2046 = vdwg.mxu0
    %v2047 = vadd.f32 %v1998, %v2041
    %v2048 = vadd.f32 %v1999, %v2044
    %v2049 = vmul.f32 %v2047, %v79
    %v2050 = vmul.f32 %v2048, %v79
    %v2051 = vxor.u32 %v2049, 2147483648
    %v2052 = vxor.u32 %v2050, 2147483648
    %v2053 = vmul.f32 %v2051, 1.442695
    %v2054 = vpow.pop %v2053
    %v2055 = vmul.f32 %v2052, 1.442695
    %v2056 = vpow.pop %v2055
    %v2057 = vadd.f32 %v2054, 1.0
    %v2058 = vadd.f32 %v2056, 1.0
    %v2059 = vrcp.pop %v2057
    %v2060 = vmul.f32 1.0, %v2059
    %v2061 = vrcp.pop %v2058
    %v2062 = vmul.f32 1.0, %v2061
    %v2063 = vmul.f32 %v2060, 2.0
    %v2064 = vmul.f32 %v2062, 2.0
    %v2065 = vsub.f32 %v2063, 1.0
    %v2066 = vsub.f32 %v2064, 1.0
    %v2067 = vsel %vm78, %v2065, %v2060
    %v2068 = vsel %vm78, %v2066, %v2062
    %v2069 = vmul.f32 %v2067, %v1983
    %v2070 = vmul.f32 %v2068, %v1984
    %2073 = vrot.lane.b32.xlu0 %v2067, 64
    %v2074 = vpop.permute.xlu0 %2073
    %2075 = vrot.lane.b32.xlu0 %v2068, 64
    %v2076 = vpop.permute.xlu0 %2075
    %v2079 = vmul.f32 %v2067, %v2074
    %v2080 = vmul.f32 %v2068, %v2076
    %2083 = vrot.lane.b32.xlu0 %v2079, 32
    %v2084 = vpop.permute.xlu0 %2083
    %2085 = vrot.lane.b32.xlu0 %v2080, 32
    %v2086 = vpop.permute.xlu0 %2085
    %v2089 = vadd.f32 %v2069, %v2084
    %v2090 = vadd.f32 %v2070, %v2086
    %v2091 = vtanh.pop %v2089
    %v2092 = vtanh.pop %v2090
    %2095 = vrot.lane.b32.xlu0 %v2091, 64
    %v2096 = vpop.permute.xlu0 %2095
    %2097 = vrot.lane.b32.xlu0 %v2092, 64
    %v2098 = vpop.permute.xlu0 %2097
    %v2101 = vmul.f32 %v2067, %v2096
    %v2102 = vmul.f32 %v2068, %v2098
    %v2103 = vpack.c.bf16 %v2102, %v2101
    %v2104 = vld [vmem:[%s1074] sm:$0xff]
    %v2105 = vld [vmem:[%s1074 + $0x8] sm:$0xff]
    %2107 = vrot.lane.b32.xlu0 %v2103, 32
    %v2108 = vpop.permute.xlu0 %2107
    %v2110 = vsel %vm307, %v2108, 0
    %2112 = vmatprep.subr.bf16.mxu0 0
    %2113 = vmatpush1.bf16.msra.mxu0 %v1366
    %2114 = vmatprep.subr.bf16.mxu0 0
    %2115 = vmatpush1.bf16.msra.mxu0 %v1367
    %2116 = vmatprep.subr.bf16.mxu0 0
    %2117 = vmatpush1.bf16.msra.mxu0 0
    %2118 = vmatprep.subr.bf16.mxu0 0
    %2119 = vmatpush1.bf16.msra.mxu0 0
    %2120 = vmatprep.subr.bf16.mxu0 0
    %2121 = vmatpush1.bf16.msra.mxu0 0
    %2122 = vmatprep.subr.bf16.mxu0 0
    %2123 = vmatpush1.bf16.msra.mxu0 0
    %2124 = vmatprep.subr.bf16.mxu0 0
    %2125 = vmatpush1.bf16.msra.mxu0 0
    %2126 = vmatprep.subr.bf16.mxu0 0
    %2127 = vmatpush1.bf16.msra.mxu0 0
    %2128 = vmatprep.subr.bf16.mxu0 0
    %2129 = vmatpush1.bf16.msra.mxu0 0
    %2130 = vmatprep.subr.bf16.mxu0 0
    %2131 = vmatpush1.bf16.msra.mxu0 0
    %2132 = vmatprep.subr.bf16.mxu0 0
    %2133 = vmatpush1.bf16.msra.mxu0 0
    %2134 = vmatprep.subr.bf16.mxu0 0
    %2135 = vmatpush1.bf16.msra.mxu0 0
    %2136 = vmatprep.subr.bf16.mxu0 0
    %2137 = vmatpush1.bf16.msra.mxu0 0
    %2138 = vmatprep.subr.bf16.mxu0 0
    %2139 = vmatpush1.bf16.msra.mxu0 0
    %2140 = vmatprep.subr.bf16.mxu0 0
    %2141 = vmatpush1.bf16.msra.mxu0 0
    %2142 = vmatprep.subr.bf16.mxu0 0
    %2143 = vmatpush1.bf16.msra.mxu0 0
    %2144 = vmatprep.mubr.bf16.mxu0 0
    %2145 = vmatmul.mubr.bf16.gmra.mrb[0].mxu0 %v2110
    %v2146 = vpop.f32.mrb[0].mxu0
    %v2147 = vadd.f32 0.0, %v2146
    %v2148 = vpop.f32.mrb[0].mxu0
    %v2149 = vpop.f32.mrb[0].mxu0
    %v2150 = vadd.f32 0.0, %v2149
    %v2151 = vpop.f32.mrb[0].mxu0
    %2152 = vdwg.mxu0
    %v2153 = vadd.f32 %v2104, %v2147
    %v2154 = vadd.f32 %v2105, %v2150
    %v2155 = vmul.f32 %v2153, %v79
    %v2156 = vmul.f32 %v2154, %v79
    %v2157 = vxor.u32 %v2155, 2147483648
    %v2158 = vxor.u32 %v2156, 2147483648
    %v2159 = vmul.f32 %v2157, 1.442695
    %v2160 = vpow.pop %v2159
    %v2161 = vmul.f32 %v2158, 1.442695
    %v2162 = vpow.pop %v2161
    %v2163 = vadd.f32 %v2160, 1.0
    %v2164 = vadd.f32 %v2162, 1.0
    %v2165 = vrcp.pop %v2163
    %v2166 = vmul.f32 1.0, %v2165
    %v2167 = vrcp.pop %v2164
    %v2168 = vmul.f32 1.0, %v2167
    %v2169 = vmul.f32 %v2166, 2.0
    %v2170 = vmul.f32 %v2168, 2.0
    %v2171 = vsub.f32 %v2169, 1.0
    %v2172 = vsub.f32 %v2170, 1.0
    %v2173 = vsel %vm78, %v2171, %v2166
    %v2174 = vsel %vm78, %v2172, %v2168
    %v2175 = vmul.f32 %v2173, %v2089
    %v2176 = vmul.f32 %v2174, %v2090
    %2179 = vrot.lane.b32.xlu0 %v2173, 64
    %v2180 = vpop.permute.xlu0 %2179
    %2181 = vrot.lane.b32.xlu0 %v2174, 64
    %v2182 = vpop.permute.xlu0 %2181
    %v2185 = vmul.f32 %v2173, %v2180
    %v2186 = vmul.f32 %v2174, %v2182
    %2189 = vrot.lane.b32.xlu0 %v2185, 32
    %v2190 = vpop.permute.xlu0 %2189
    %2191 = vrot.lane.b32.xlu0 %v2186, 32
    %v2192 = vpop.permute.xlu0 %2191
    %v2195 = vadd.f32 %v2175, %v2190
    %v2196 = vadd.f32 %v2176, %v2192
    %v2197 = vtanh.pop %v2195
    %v2198 = vtanh.pop %v2196
    %2201 = vrot.lane.b32.xlu0 %v2197, 64
    %v2202 = vpop.permute.xlu0 %2201
    %2203 = vrot.lane.b32.xlu0 %v2198, 64
    %v2204 = vpop.permute.xlu0 %2203
    %v2207 = vmul.f32 %v2173, %v2202
    %v2208 = vmul.f32 %v2174, %v2204
    %v2209 = vpack.c.bf16 %v2208, %v2207
    %v2210 = vld [vmem:[%s7] sm:$0xf]
    %v2211 = vld [vmem:[%s7 + $0x4] sm:$0xf]
    %v2212 = vld [vmem:[%s7 + $0x8] sm:$0xf]
    %v2213 = vld [vmem:[%s7 + $0xc] sm:$0xf]
    %v2214 = vld [vmem:[%s8] sm:$0x1]
    %v2216 = vlaneseq
    %v2217 = vshrl.u32 %v2216, 7
    %v2218 = vsub.s32 0, %v2217
    %v2219 = vrot.slane %v2214, %v2218
    %2222 = vrot.lane.b32.xlu0 %v2209, 32
    %v2223 = vpop.permute.xlu0 %2222
    %v2228 = vunpack.c.l.b16 %v2210
    %v2229 = vunpack.c.l.b16 %v2211
    %v2230 = vunpack.c.l.b16 %v2212
    %v2231 = vunpack.c.l.b16 %v2213
    %v2232 = vpack.c.b16 %v2229, %v2228
    %v2233 = vpack.c.b16 %v2231, %v2230
    %v2237 = vsel %vm307, %v2223, 0
    %2239 = vmatprep.subr.bf16.mxu0 0
    %2240 = vmatpush1.bf16.msra.mxu0 %v2232
    %2241 = vmatprep.subr.bf16.mxu0 0
    %2242 = vmatpush1.bf16.msra.mxu0 %v2233
    %2243 = vmatprep.subr.bf16.mxu0 0
    %2244 = vmatpush1.bf16.msra.mxu0 0
    %2245 = vmatprep.subr.bf16.mxu0 0
    %2246 = vmatpush1.bf16.msra.mxu0 0
    %2247 = vmatprep.subr.bf16.mxu0 0
    %2248 = vmatpush1.bf16.msra.mxu0 0
    %2249 = vmatprep.subr.bf16.mxu0 0
    %2250 = vmatpush1.bf16.msra.mxu0 0
    %2251 = vmatprep.subr.bf16.mxu0 0
    %2252 = vmatpush1.bf16.msra.mxu0 0
    %2253 = vmatprep.subr.bf16.mxu0 0
    %2254 = vmatpush1.bf16.msra.mxu0 0
    %2255 = vmatprep.subr.bf16.mxu0 0
    %2256 = vmatpush1.bf16.msra.mxu0 0
    %2257 = vmatprep.subr.bf16.mxu0 0
    %2258 = vmatpush1.bf16.msra.mxu0 0
    %2259 = vmatprep.subr.bf16.mxu0 0
    %2260 = vmatpush1.bf16.msra.mxu0 0
    %2261 = vmatprep.subr.bf16.mxu0 0
    %2262 = vmatpush1.bf16.msra.mxu0 0
    %2263 = vmatprep.subr.bf16.mxu0 0
    %2264 = vmatpush1.bf16.msra.mxu0 0
    %2265 = vmatprep.subr.bf16.mxu0 0
    %2266 = vmatpush1.bf16.msra.mxu0 0
    %2267 = vmatprep.subr.bf16.mxu0 0
    %2268 = vmatpush1.bf16.msra.mxu0 0
    %2269 = vmatprep.subr.bf16.mxu0 0
    %2270 = vmatpush1.bf16.msra.mxu0 0
    %2271 = vmatprep.mubr.bf16.mxu0 0
    %2272 = vmatmul.mubr.bf16.gmra.mrb[0].mxu0 %v2237
    %v2273 = vpop.f32.mrb[0].mxu0
    %v2274 = vadd.f32 %v2219, %v2273
    %v2275 = vpop.f32.mrb[0].mxu0
    %v2276 = vpop.f32.mrb[0].mxu0
    %v2277 = vadd.f32 %v2219, %v2276
    %v2278 = vpop.f32.mrb[0].mxu0
    %2279 = vdwg.mxu0
    %vm2280 = vcmask 64512
    %2281 = vst.msk [vmem:[%s9] sm:$0xff] %vm2280, %v2274
    %2282 = vst.msk [vmem:[%s9 + $0x8] sm:$0xff] %vm2280, %v2277
    // Predicated region
    $region50: #{tpu_custom_call.1} parent=1 // pred_check
      _
    $region51: #{tpu_custom_call.1} parent=1 // pred_check_branch
      %2284 = sbr.rel (0) target = $region53
    $region52: #{tpu_custom_call.1} parent=1 // pred_region
      _
    $region53: #{tpu_custom_call.1} parent=1 // pred_fallthru
      _
    // Predicated region
    $region54: #{tpu_custom_call.1} parent=1 // pred_check
      _
    $region55: #{tpu_custom_call.1} parent=1 // pred_check_branch
      %2286 = sbr.rel (0) target = $region57
    $region56: #{tpu_custom_call.1} parent=1 // pred_region
      _
    $region57: #{tpu_custom_call.1} parent=1 // pred_fallthru
      _
    %2287 = vsyncpa [#allocation5], 1
    %2288 = vsyncpa [#allocation7], 1

</llo_original>
